<compile_context>
chip_gen: v7x
topology: tpu7x:2x2x1
jax: 0.10.0
libtpu: 0.0.40
codegen_flags: <defaults>
</compile_context>

<pallas_src>
import functools

import jax
import jax.numpy as jnp
import numpy as np
from jax import lax
from jax.experimental import pallas as pl
from jax.experimental.pallas import tpu as pltpu


def _round_up(x, m):
    return (x + m - 1) // m * m


def _fused_lstm_chunk_kernel(xg_f_ref, xg_b_ref, whh_f_ref, whh_b_ref,
                             out_f_ref, out_b_ref,
                             h_f, c_f, h_b, c_b, *, t_chunk, batch, hidden):
    """One time-chunk grid step running BOTH direction chains, interleaved.

    xg_f_ref : (Tc*B, 4H) forward gate preactivations for chunk i (ascending time).
    xg_b_ref : (Tc*B, 4H) backward gate preactivations for chunk nblk-1-i.
    whh_*_ref: (H, 4H)    recurrent weights (pre-transposed), resident across grid.
    out_*_ref: (Tc*B, H)  hidden-state outputs for the respective chunks.
    h_*, c_* : (B, H)     carried states (persist across the chunk grid axis).
    B and H here are the padded sizes (B % 8 == 0, H % 128 == 0).
    """
    i = pl.program_id(0)
    Tc, B, H = t_chunk, batch, hidden

    @pl.when(i == 0)              # both direction chains start at grid step 0
    def _():
        h_f[...] = jnp.zeros_like(h_f)
        c_f[...] = jnp.zeros_like(c_f)
        h_b[...] = jnp.zeros_like(h_b)
        c_b[...] = jnp.zeros_like(c_b)

    # Block index is constant across the grid -> not re-DMA'd every step.
    w_f = whh_f_ref[...]
    w_b = whh_b_ref[...]

    def sig(x):
        # One EUP tanh + VPU fma instead of exp + divide; exact identity.
        return 0.5 * jnp.tanh(0.5 * x) + 0.5

    def cell(gates, c_prev):
        # PyTorch gate order: i, f, g, o
        i_g = sig(gates[:, 0 * H:1 * H])
        f_g = sig(gates[:, 1 * H:2 * H])
        g_g = jnp.tanh(gates[:, 2 * H:3 * H])
        o_g = sig(gates[:, 3 * H:4 * H])
        c = f_g * c_prev + i_g * g_g
        h = o_g * jnp.tanh(c)
        return h, c

    def step(t, carry):
        # Forward walks its chunk top->bottom, backward walks its chunk bottom->top.
        # B is a multiple of 8, so every row offset is sublane-aligned.
        row_f = pl.multiple_of(t * B, 8)
        row_b = pl.multiple_of((Tc - 1 - t) * B, 8)

        # Two independent chains back-to-back: one direction's MXU latency hides the
        # other direction's sigmoid/tanh/elementwise work.
        g_f = xg_f_ref[pl.ds(row_f, B), :] + jnp.dot(
            h_f[...], w_f, preferred_element_type=jnp.float32)
        g_b = xg_b_ref[pl.ds(row_b, B), :] + jnp.dot(
            h_b[...], w_b, preferred_element_type=jnp.float32)

        hf, cf = cell(g_f, c_f[...])
        hb, cb = cell(g_b, c_b[...])

        h_f[...] = hf
        c_f[...] = cf
        h_b[...] = hb
        c_b[...] = cb
        out_f_ref[pl.ds(row_f, B), :] = hf.astype(out_f_ref.dtype)
        out_b_ref[pl.ds(row_b, B), :] = hb.astype(out_b_ref.dtype)
        return carry

    # Bounded unroll: enough LLO visibility to overlap the two chains, without
    # letting hundreds of steps' live ranges pile up in 64 vregs.
    lax.fori_loop(0, Tc, step, None, unroll=min(Tc, 4))


def _pick_t_chunk(T, Bp, Hp, target_bytes=2 << 20):
    """Largest divisor Tc of T whose (Tc*Bp, 4Hp) f32 tile fits target_bytes."""
    divisors = [tc for tc in range(1, T + 1) if T % tc == 0]
    fitting = [tc for tc in divisors if tc * Bp * 4 * Hp * 4 <= target_bytes]
    return max(fitting) if fitting else 1


def _pad_gates(w_ih, w_hh, b_ih, b_hh, H, Hp):
    """Zero-pad per-gate blocks of PyTorch-layout LSTM weights from H to Hp.

    Returns (w_ih_p (4Hp, nIn), w_hh_p (4Hp, Hp), bias_p (4Hp,)) with zeros in the
    padded positions, which keeps the padded h/c lanes exactly zero in the kernel.
    """
    nIn = w_ih.shape[1]
    wih4 = w_ih.reshape(4, H, nIn)
    whh4 = w_hh.reshape(4, H, H)
    b4 = (b_ih + b_hh).reshape(4, H)
    wih_p = jnp.zeros((4, Hp, nIn), jnp.float32).at[:, :H, :].set(wih4)
    whh_p = jnp.zeros((4, Hp, Hp), jnp.float32).at[:, :H, :H].set(whh4)
    b_p = jnp.zeros((4, Hp), jnp.float32).at[:, :H].set(b4)
    return wih_p.reshape(4 * Hp, nIn), whh_p.reshape(4 * Hp, Hp), b_p.reshape(4 * Hp)


@functools.partial(jax.jit, static_argnames=("t_chunk",))
def bidirectional_lstm(x, params, *, t_chunk=None):
    """x: (T, B, nIn) float32 -> (T, B, 2*H) float32 (PyTorch nn.LSTM layout)."""
    T, B, nIn = x.shape
    H = params["whh_f"].shape[1]                 # PyTorch weight_hh: (4H, H)
    Bp = _round_up(B, 8)                         # sublane-align the per-step rows
    Hp = _round_up(H, 128)                       # lane-align every gate slice

    if t_chunk is None:
        t_chunk = _pick_t_chunk(T, Bp, Hp)
    assert T % t_chunk == 0, "t_chunk must divide the sequence length"
    nblk = T // t_chunk
    rows = t_chunk * Bp

    hp = jax.lax.Precision.HIGHEST
    x = x.astype(jnp.float32)
    x_p = jnp.pad(x, ((0, 0), (0, Bp - B), (0, 0)))          # (T, Bp, nIn)
    x2 = x_p.reshape(T * Bp, nIn)

    wih_f, whh_f, bias_f = _pad_gates(params["wih_f"], params["whh_f"],
                                      params["b_ih_f"], params["b_hh_f"], H, Hp)
    wih_b, whh_b, bias_b = _pad_gates(params["wih_b"], params["whh_b"],
                                      params["b_ih_b"], params["b_hh_b"], H, Hp)

    # ---- Time-parallel input projection + bias folding, in XLA (fuses upstream).
    xg_f = jnp.dot(x2, wih_f.T, precision=hp) + bias_f       # (T*Bp, 4Hp)
    xg_b = jnp.dot(x2, wih_b.T, precision=hp) + bias_b       # (T*Bp, 4Hp)
    whh_f_t = whh_f.T                                        # (Hp, 4Hp)
    whh_b_t = whh_b.T

    kernel = functools.partial(_fused_lstm_chunk_kernel,
                               t_chunk=t_chunk, batch=Bp, hidden=Hp)

    out_f, out_b = pl.pallas_call(
        kernel,
        out_shape=(jax.ShapeDtypeStruct((T * Bp, Hp), jnp.float32),
                   jax.ShapeDtypeStruct((T * Bp, Hp), jnp.float32)),
        grid_spec=pltpu.PrefetchScalarGridSpec(
            num_scalar_prefetch=0,
            grid=(nblk,),                                    # time-chunk axis only
            in_specs=[
                pl.BlockSpec((rows, 4 * Hp), lambda i: (i, 0)),              # fwd xg
                pl.BlockSpec((rows, 4 * Hp), lambda i: (nblk - 1 - i, 0)),   # bwd xg
                pl.BlockSpec((Hp, 4 * Hp), lambda i: (0, 0)),                # whh fwd
                pl.BlockSpec((Hp, 4 * Hp), lambda i: (0, 0)),                # whh bwd
            ],
            out_specs=(
                pl.BlockSpec((rows, Hp), lambda i: (i, 0)),                  # fwd out
                pl.BlockSpec((rows, Hp), lambda i: (nblk - 1 - i, 0)),       # bwd out
            ),
            scratch_shapes=[pltpu.VMEM((Bp, Hp), jnp.float32)] * 4,  # h_f, c_f, h_b, c_b
        ),
        compiler_params=pltpu.CompilerParams(
            # h/c are carried across the single grid axis -> sequential.
            dimension_semantics=("arbitrary",),
            vmem_limit_bytes=32 * 1024 * 1024,
        ),
    )(xg_f, xg_b, whh_f_t, whh_b_t)

    out_f = out_f.reshape(T, Bp, Hp)[:, :B, :H]
    out_b = out_b.reshape(T, Bp, Hp)[:, :B, :H]
    return jnp.concatenate([out_f, out_b], axis=-1)          # (T, B, 2H)


# ---------- pure-JAX reference (correctness check only) ----------
def _lstm_scan_ref(xg, whh_t, H):
    B = xg.shape[1]

    def step(carry, g_in):
        h, c = carry
        gates = g_in + jnp.dot(h, whh_t, precision=jax.lax.Precision.HIGHEST)
        i = jax.nn.sigmoid(gates[:, 0 * H:1 * H])
        f = jax.nn.sigmoid(gates[:, 1 * H:2 * H])
        g = jnp.tanh(gates[:, 2 * H:3 * H])
        o = jax.nn.sigmoid(gates[:, 3 * H:4 * H])
        c = f * c + i * g
        h = o * jnp.tanh(c)
        return (h, c), h

    init = (jnp.zeros((B, H), jnp.float32), jnp.zeros((B, H), jnp.float32))
    _, hs = jax.lax.scan(step, init, xg)
    return hs


def reference_bilstm(x, params):
    T, B, nIn = x.shape
    H = params["whh_f"].shape[1]
    hp = jax.lax.Precision.HIGHEST
    x2 = x.reshape(T * B, nIn)
    xg_f = (jnp.dot(x2, params["wih_f"].T, precision=hp)
            + params["b_ih_f"] + params["b_hh_f"]).reshape(T, B, 4 * H)
    xg_b = (jnp.dot(x2, params["wih_b"].T, precision=hp)
            + params["b_ih_b"] + params["b_hh_b"]).reshape(T, B, 4 * H)
    hs_f = _lstm_scan_ref(xg_f, params["whh_f"].T, H)
    hs_b = _lstm_scan_ref(xg_b[::-1], params["whh_b"].T, H)[::-1]
    return jnp.concatenate([hs_f, hs_b], axis=-1)


def _make_params(key, nIn, H):
    keys = jax.random.split(key, 8)
    bound = 1.0 / float(np.sqrt(H))          # PyTorch LSTM default init range

    def u(k, shape):
        return jax.random.uniform(k, shape, jnp.float32, -bound, bound)

    return {
        "wih_f": u(keys[0], (4 * H, nIn)),
        "whh_f": u(keys[1], (4 * H, H)),
        "b_ih_f": u(keys[2], (4 * H,)),
        "b_hh_f": u(keys[3], (4 * H,)),
        "wih_b": u(keys[4], (4 * H, nIn)),
        "whh_b": u(keys[5], (4 * H, H)),
        "b_ih_b": u(keys[6], (4 * H,)),
        "b_hh_b": u(keys[7], (4 * H,)),
    }


if __name__ == "__main__":
    key = jax.random.PRNGKey(0)
    kp1, kp2, kx = jax.random.split(key, 3)

    # Config 1: small shapes (seq=8, batch=2, nIn=4, hidden=32).  H < 128 and B < 8
    # exercise the pad-to-(8,128) path; t_chunk=4 exercises the carried h/c state
    # across two streamed time chunks (forward ascending, backward descending).
    T, B, nIn, H = 8, 2, 4, 32
    params = _make_params(kp1, nIn, H)
    x = jax.random.normal(kx, (T, B, nIn), jnp.float32)

    out = jax.block_until_ready(bidirectional_lstm(x, params, t_chunk=4))
    assert out.shape == (T, B, 2 * H), out.shape
    ref = jax.block_until_ready(reference_bilstm(x, params))
    np.testing.assert_allclose(np.asarray(out), np.asarray(ref), atol=1e-5, rtol=1e-5)

    # Config 2: lane-aligned hidden size (H = 128), auto-picked chunk (single chunk,
    # nblk == 1) exercising the no-padding / single-grid-step path.
    H2 = 128
    params2 = _make_params(kp2, nIn, H2)
    out2 = jax.block_until_ready(bidirectional_lstm(x, params2))
    assert out2.shape == (T, B, 2 * H2), out2.shape
    ref2 = jax.block_until_ready(reference_bilstm(x, params2))
    np.testing.assert_allclose(np.asarray(out2), np.asarray(ref2), atol=1e-5, rtol=1e-5)

    print("KERNEL_OK")
</pallas_src>

<mosaic_0001>
module attributes {stable_mosaic.version = 11 : i64} {
  func.func @_fused_lstm_chunk_kernel(%arg0: i32, %arg1: memref<32x512xf32, #tpu.memory_space<vmem>>, %arg2: memref<32x512xf32, #tpu.memory_space<vmem>>, %arg3: memref<128x512xf32, #tpu.memory_space<vmem>>, %arg4: memref<128x512xf32, #tpu.memory_space<vmem>>, %arg5: memref<32x128xf32, #tpu.memory_space<vmem>>, %arg6: memref<32x128xf32, #tpu.memory_space<vmem>>, %arg7: memref<8x128xf32, #tpu.memory_space<vmem>>, %arg8: memref<8x128xf32, #tpu.memory_space<vmem>>, %arg9: memref<8x128xf32, #tpu.memory_space<vmem>>, %arg10: memref<8x128xf32, #tpu.memory_space<vmem>>) attributes {dimension_semantics = [#tpu.dimension_semantics<arbitrary>], iteration_bounds = array<i64: 2>, scalar_prefetch = 0 : i64, scratch_operands = 4 : i64, tpu.core_type = #tpu.core_type<tc>, window_params = [{transform_indices = @transform_0, window_bounds = array<i64: 32, 512>}, {transform_indices = @transform_1, window_bounds = array<i64: 32, 512>}, {pipeline_mode = #tpu.pipeline_mode<synchronous>, transform_indices = @transform_2, window_bounds = array<i64: 128, 512>}, {pipeline_mode = #tpu.pipeline_mode<synchronous>, transform_indices = @transform_3, window_bounds = array<i64: 128, 512>}, {transform_indices = @transform_4, window_bounds = array<i64: 32, 128>}, {transform_indices = @transform_5, window_bounds = array<i64: 32, 128>}]} {
    %c0_i32 = arith.constant 0 : i32
    %0 = arith.cmpi eq, %arg0, %c0_i32 : i32
    %1 = arith.extui %0 : i1 to i32
    %c0_i32_0 = arith.constant 0 : i32
    %2 = arith.cmpi ne, %1, %c0_i32_0 : i32
    scf.if %2 {
      %cst_175 = arith.constant 0.000000e+00 : f32
      %353 = vector.broadcast %cst_175 : f32 to vector<8x128xf32>
      %c0_176 = arith.constant 0 : index
      %c0_177 = arith.constant 0 : index
      %354 = vector.load %arg7[%c0_176, %c0_177] : memref<8x128xf32, #tpu.memory_space<vmem>>, vector<8x128xf32>
      tpu.vector_store %arg7[%c0_176, %c0_177], %353 {strides = array<i32>} : memref<8x128xf32, #tpu.memory_space<vmem>>, vector<8x128xf32>,
      %cst_178 = arith.constant 0.000000e+00 : f32
      %355 = vector.broadcast %cst_178 : f32 to vector<8x128xf32>
      %c0_179 = arith.constant 0 : index
      %c0_180 = arith.constant 0 : index
      %356 = vector.load %arg8[%c0_179, %c0_180] : memref<8x128xf32, #tpu.memory_space<vmem>>, vector<8x128xf32>
      tpu.vector_store %arg8[%c0_179, %c0_180], %355 {strides = array<i32>} : memref<8x128xf32, #tpu.memory_space<vmem>>, vector<8x128xf32>,
      %cst_181 = arith.constant 0.000000e+00 : f32
      %357 = vector.broadcast %cst_181 : f32 to vector<8x128xf32>
      %c0_182 = arith.constant 0 : index
      %c0_183 = arith.constant 0 : index
      %358 = vector.load %arg9[%c0_182, %c0_183] : memref<8x128xf32, #tpu.memory_space<vmem>>, vector<8x128xf32>
      tpu.vector_store %arg9[%c0_182, %c0_183], %357 {strides = array<i32>} : memref<8x128xf32, #tpu.memory_space<vmem>>, vector<8x128xf32>,
      %cst_184 = arith.constant 0.000000e+00 : f32
      %359 = vector.broadcast %cst_184 : f32 to vector<8x128xf32>
      %c0_185 = arith.constant 0 : index
      %c0_186 = arith.constant 0 : index
      %360 = vector.load %arg10[%c0_185, %c0_186] : memref<8x128xf32, #tpu.memory_space<vmem>>, vector<8x128xf32>
      tpu.vector_store %arg10[%c0_185, %c0_186], %359 {strides = array<i32>} : memref<8x128xf32, #tpu.memory_space<vmem>>, vector<8x128xf32>,
    } else {
    }
    %c0 = arith.constant 0 : index
    %c0_1 = arith.constant 0 : index
    %3 = vector.load %arg3[%c0, %c0_1] : memref<128x512xf32, #tpu.memory_space<vmem>>, vector<128x512xf32>
    %c0_2 = arith.constant 0 : index
    %c0_3 = arith.constant 0 : index
    %4 = vector.load %arg4[%c0_2, %c0_3] : memref<128x512xf32, #tpu.memory_space<vmem>>, vector<128x512xf32>
    %c0_i32_4 = arith.constant 0 : i32
    %c8_i32 = arith.constant 8 : i32
    %5 = arith.muli %c0_i32_4, %c8_i32 : i32
    %6 = tpu.assume_multiple %5, 8 : i32
    %c3_i32 = arith.constant 3 : i32
    %7 = arith.subi %c3_i32, %c0_i32_4 : i32
    %c8_i32_5 = arith.constant 8 : i32
    %8 = arith.muli %7, %c8_i32_5 : i32
    %9 = tpu.assume_multiple %8, 8 : i32
    %10 = arith.index_cast %6 : i32 to index
    %c0_6 = arith.constant 0 : index
    %11 = vector.load %arg1[%10, %c0_6] : memref<32x512xf32, #tpu.memory_space<vmem>>, vector<8x512xf32>
    %c0_7 = arith.constant 0 : index
    %c0_8 = arith.constant 0 : index
    %12 = vector.load %arg7[%c0_7, %c0_8] : memref<8x128xf32, #tpu.memory_space<vmem>>, vector<8x128xf32>
    %cst = arith.constant dense<0.000000e+00> : vector<8x512xf32>
    %13 = tpu.matmul %12, %3, %cst {dimension_numbers = #tpu.dot_dimension_numbers<[1], [0], [0], [1], [0, 0, 1, 1], [], []>} : vector<8x128xf32>, vector<128x512xf32>, vector<8x512xf32> -> vector<8x512xf32>
    %14 = arith.addf %11, %13 : vector<8x512xf32>
    %15 = arith.index_cast %9 : i32 to index
    %c0_9 = arith.constant 0 : index
    %16 = vector.load %arg2[%15, %c0_9] : memref<32x512xf32, #tpu.memory_space<vmem>>, vector<8x512xf32>
    %c0_10 = arith.constant 0 : index
    %c0_11 = arith.constant 0 : index
    %17 = vector.load %arg9[%c0_10, %c0_11] : memref<8x128xf32, #tpu.memory_space<vmem>>, vector<8x128xf32>
    %cst_12 = arith.constant dense<0.000000e+00> : vector<8x512xf32>
    %18 = tpu.matmul %17, %4, %cst_12 {dimension_numbers = #tpu.dot_dimension_numbers<[1], [0], [0], [1], [0, 0, 1, 1], [], []>} : vector<8x128xf32>, vector<128x512xf32>, vector<8x512xf32> -> vector<8x512xf32>
    %19 = arith.addf %16, %18 : vector<8x512xf32>
    %c0_13 = arith.constant 0 : index
    %c0_14 = arith.constant 0 : index
    %20 = vector.load %arg8[%c0_13, %c0_14] : memref<8x128xf32, #tpu.memory_space<vmem>>, vector<8x128xf32>
    %21 = vector.extract_strided_slice %14 {offsets = [0, 0], sizes = [8, 128], strides = [1, 1]} : vector<8x512xf32> to vector<8x128xf32>
    %cst_15 = arith.constant 5.000000e-01 : f32
    %22 = vector.broadcast %cst_15 : f32 to vector<8x128xf32>
    %23 = arith.mulf %22, %21 : vector<8x128xf32>
    %24 = math.tanh %23 : vector<8x128xf32>
    %cst_16 = arith.constant 5.000000e-01 : f32
    %25 = vector.broadcast %cst_16 : f32 to vector<8x128xf32>
    %26 = arith.mulf %25, %24 : vector<8x128xf32>
    %cst_17 = arith.constant 5.000000e-01 : f32
    %27 = vector.broadcast %cst_17 : f32 to vector<8x128xf32>
    %28 = arith.addf %26, %27 : vector<8x128xf32>
    %29 = vector.extract_strided_slice %14 {offsets = [0, 128], sizes = [8, 128], strides = [1, 1]} : vector<8x512xf32> to vector<8x128xf32>
    %cst_18 = arith.constant 5.000000e-01 : f32
    %30 = vector.broadcast %cst_18 : f32 to vector<8x128xf32>
    %31 = arith.mulf %30, %29 : vector<8x128xf32>
    %32 = math.tanh %31 : vector<8x128xf32>
    %cst_19 = arith.constant 5.000000e-01 : f32
    %33 = vector.broadcast %cst_19 : f32 to vector<8x128xf32>
    %34 = arith.mulf %33, %32 : vector<8x128xf32>
    %cst_20 = arith.constant 5.000000e-01 : f32
    %35 = vector.broadcast %cst_20 : f32 to vector<8x128xf32>
    %36 = arith.addf %34, %35 : vector<8x128xf32>
    %37 = vector.extract_strided_slice %14 {offsets = [0, 256], sizes = [8, 128], strides = [1, 1]} : vector<8x512xf32> to vector<8x128xf32>
    %38 = math.tanh %37 : vector<8x128xf32>
    %39 = vector.extract_strided_slice %14 {offsets = [0, 384], sizes = [8, 128], strides = [1, 1]} : vector<8x512xf32> to vector<8x128xf32>
    %cst_21 = arith.constant 5.000000e-01 : f32
    %40 = vector.broadcast %cst_21 : f32 to vector<8x128xf32>
    %41 = arith.mulf %40, %39 : vector<8x128xf32>
    %42 = math.tanh %41 : vector<8x128xf32>
    %cst_22 = arith.constant 5.000000e-01 : f32
    %43 = vector.broadcast %cst_22 : f32 to vector<8x128xf32>
    %44 = arith.mulf %43, %42 : vector<8x128xf32>
    %cst_23 = arith.constant 5.000000e-01 : f32
    %45 = vector.broadcast %cst_23 : f32 to vector<8x128xf32>
    %46 = arith.addf %44, %45 : vector<8x128xf32>
    %47 = arith.mulf %36, %20 : vector<8x128xf32>
    %48 = arith.mulf %28, %38 : vector<8x128xf32>
    %49 = arith.addf %47, %48 : vector<8x128xf32>
    %50 = math.tanh %49 : vector<8x128xf32>
    %51 = arith.mulf %46, %50 : vector<8x128xf32>
    %c0_24 = arith.constant 0 : index
    %c0_25 = arith.constant 0 : index
    %52 = vector.load %arg10[%c0_24, %c0_25] : memref<8x128xf32, #tpu.memory_space<vmem>>, vector<8x128xf32>
    %53 = vector.extract_strided_slice %19 {offsets = [0, 0], sizes = [8, 128], strides = [1, 1]} : vector<8x512xf32> to vector<8x128xf32>
    %cst_26 = arith.constant 5.000000e-01 : f32
    %54 = vector.broadcast %cst_26 : f32 to vector<8x128xf32>
    %55 = arith.mulf %54, %53 : vector<8x128xf32>
    %56 = math.tanh %55 : vector<8x128xf32>
    %cst_27 = arith.constant 5.000000e-01 : f32
    %57 = vector.broadcast %cst_27 : f32 to vector<8x128xf32>
    %58 = arith.mulf %57, %56 : vector<8x128xf32>
    %cst_28 = arith.constant 5.000000e-01 : f32
    %59 = vector.broadcast %cst_28 : f32 to vector<8x128xf32>
    %60 = arith.addf %58, %59 : vector<8x128xf32>
    %61 = vector.extract_strided_slice %19 {offsets = [0, 128], sizes = [8, 128], strides = [1, 1]} : vector<8x512xf32> to vector<8x128xf32>
    %cst_29 = arith.constant 5.000000e-01 : f32
    %62 = vector.broadcast %cst_29 : f32 to vector<8x128xf32>
    %63 = arith.mulf %62, %61 : vector<8x128xf32>
    %64 = math.tanh %63 : vector<8x128xf32>
    %cst_30 = arith.constant 5.000000e-01 : f32
    %65 = vector.broadcast %cst_30 : f32 to vector<8x128xf32>
    %66 = arith.mulf %65, %64 : vector<8x128xf32>
    %cst_31 = arith.constant 5.000000e-01 : f32
    %67 = vector.broadcast %cst_31 : f32 to vector<8x128xf32>
    %68 = arith.addf %66, %67 : vector<8x128xf32>
    %69 = vector.extract_strided_slice %19 {offsets = [0, 256], sizes = [8, 128], strides = [1, 1]} : vector<8x512xf32> to vector<8x128xf32>
    %70 = math.tanh %69 : vector<8x128xf32>
    %71 = vector.extract_strided_slice %19 {offsets = [0, 384], sizes = [8, 128], strides = [1, 1]} : vector<8x512xf32> to vector<8x128xf32>
    %cst_32 = arith.constant 5.000000e-01 : f32
    %72 = vector.broadcast %cst_32 : f32 to vector<8x128xf32>
    %73 = arith.mulf %72, %71 : vector<8x128xf32>
    %74 = math.tanh %73 : vector<8x128xf32>
    %cst_33 = arith.constant 5.000000e-01 : f32
    %75 = vector.broadcast %cst_33 : f32 to vector<8x128xf32>
    %76 = arith.mulf %75, %74 : vector<8x128xf32>
    %cst_34 = arith.constant 5.000000e-01 : f32
    %77 = vector.broadcast %cst_34 : f32 to vector<8x128xf32>
    %78 = arith.addf %76, %77 : vector<8x128xf32>
    %79 = arith.mulf %68, %52 : vector<8x128xf32>
    %80 = arith.mulf %60, %70 : vector<8x128xf32>
    %81 = arith.addf %79, %80 : vector<8x128xf32>
    %82 = math.tanh %81 : vector<8x128xf32>
    %83 = arith.mulf %78, %82 : vector<8x128xf32>
    %c0_35 = arith.constant 0 : index
    %c0_36 = arith.constant 0 : index
    %84 = vector.load %arg7[%c0_35, %c0_36] : memref<8x128xf32, #tpu.memory_space<vmem>>, vector<8x128xf32>
    tpu.vector_store %arg7[%c0_35, %c0_36], %51 {strides = array<i32>} : memref<8x128xf32, #tpu.memory_space<vmem>>, vector<8x128xf32>,
    %c0_37 = arith.constant 0 : index
    %c0_38 = arith.constant 0 : index
    %85 = vector.load %arg8[%c0_37, %c0_38] : memref<8x128xf32, #tpu.memory_space<vmem>>, vector<8x128xf32>
    tpu.vector_store %arg8[%c0_37, %c0_38], %49 {strides = array<i32>} : memref<8x128xf32, #tpu.memory_space<vmem>>, vector<8x128xf32>,
    %c0_39 = arith.constant 0 : index
    %c0_40 = arith.constant 0 : index
    %86 = vector.load %arg9[%c0_39, %c0_40] : memref<8x128xf32, #tpu.memory_space<vmem>>, vector<8x128xf32>
    tpu.vector_store %arg9[%c0_39, %c0_40], %83 {strides = array<i32>} : memref<8x128xf32, #tpu.memory_space<vmem>>, vector<8x128xf32>,
    %c0_41 = arith.constant 0 : index
    %c0_42 = arith.constant 0 : index
    %87 = vector.load %arg10[%c0_41, %c0_42] : memref<8x128xf32, #tpu.memory_space<vmem>>, vector<8x128xf32>
    tpu.vector_store %arg10[%c0_41, %c0_42], %81 {strides = array<i32>} : memref<8x128xf32, #tpu.memory_space<vmem>>, vector<8x128xf32>,
    %88 = arith.index_cast %6 : i32 to index
    %c0_43 = arith.constant 0 : index
    %89 = vector.load %arg5[%88, %c0_43] : memref<32x128xf32, #tpu.memory_space<vmem>>, vector<8x128xf32>
    tpu.vector_store %arg5[%88, %c0_43], %51 {strides = array<i32>} : memref<32x128xf32, #tpu.memory_space<vmem>>, vector<8x128xf32>,
    %90 = arith.index_cast %9 : i32 to index
    %c0_44 = arith.constant 0 : index
    %91 = vector.load %arg6[%90, %c0_44] : memref<32x128xf32, #tpu.memory_space<vmem>>, vector<8x128xf32>
    tpu.vector_store %arg6[%90, %c0_44], %83 {strides = array<i32>} : memref<32x128xf32, #tpu.memory_space<vmem>>, vector<8x128xf32>,
    %c1_i32 = arith.constant 1 : i32
    %c8_i32_45 = arith.constant 8 : i32
    %92 = arith.muli %c1_i32, %c8_i32_45 : i32
    %93 = tpu.assume_multiple %92, 8 : i32
    %c3_i32_46 = arith.constant 3 : i32
    %94 = arith.subi %c3_i32_46, %c1_i32 : i32
    %c8_i32_47 = arith.constant 8 : i32
    %95 = arith.muli %94, %c8_i32_47 : i32
    %96 = tpu.assume_multiple %95, 8 : i32
    %97 = arith.index_cast %93 : i32 to index
    %c0_48 = arith.constant 0 : index
    %98 = vector.load %arg1[%97, %c0_48] : memref<32x512xf32, #tpu.memory_space<vmem>>, vector<8x512xf32>
    %c0_49 = arith.constant 0 : index
    %c0_50 = arith.constant 0 : index
    %99 = vector.load %arg7[%c0_49, %c0_50] : memref<8x128xf32, #tpu.memory_space<vmem>>, vector<8x128xf32>
    %cst_51 = arith.constant dense<0.000000e+00> : vector<8x512xf32>
    %100 = tpu.matmul %99, %3, %cst_51 {dimension_numbers = #tpu.dot_dimension_numbers<[1], [0], [0], [1], [0, 0, 1, 1], [], []>} : vector<8x128xf32>, vector<128x512xf32>, vector<8x512xf32> -> vector<8x512xf32>
    %101 = arith.addf %98, %100 : vector<8x512xf32>
    %102 = arith.index_cast %96 : i32 to index
    %c0_52 = arith.constant 0 : index
    %103 = vector.load %arg2[%102, %c0_52] : memref<32x512xf32, #tpu.memory_space<vmem>>, vector<8x512xf32>
    %c0_53 = arith.constant 0 : index
    %c0_54 = arith.constant 0 : index
    %104 = vector.load %arg9[%c0_53, %c0_54] : memref<8x128xf32, #tpu.memory_space<vmem>>, vector<8x128xf32>
    %cst_55 = arith.constant dense<0.000000e+00> : vector<8x512xf32>
    %105 = tpu.matmul %104, %4, %cst_55 {dimension_numbers = #tpu.dot_dimension_numbers<[1], [0], [0], [1], [0, 0, 1, 1], [], []>} : vector<8x128xf32>, vector<128x512xf32>, vector<8x512xf32> -> vector<8x512xf32>
    %106 = arith.addf %103, %105 : vector<8x512xf32>
    %c0_56 = arith.constant 0 : index
    %c0_57 = arith.constant 0 : index
    %107 = vector.load %arg8[%c0_56, %c0_57] : memref<8x128xf32, #tpu.memory_space<vmem>>, vector<8x128xf32>
    %108 = vector.extract_strided_slice %101 {offsets = [0, 0], sizes = [8, 128], strides = [1, 1]} : vector<8x512xf32> to vector<8x128xf32>
    %cst_58 = arith.constant 5.000000e-01 : f32
    %109 = vector.broadcast %cst_58 : f32 to vector<8x128xf32>
    %110 = arith.mulf %109, %108 : vector<8x128xf32>
    %111 = math.tanh %110 : vector<8x128xf32>
    %cst_59 = arith.constant 5.000000e-01 : f32
    %112 = vector.broadcast %cst_59 : f32 to vector<8x128xf32>
    %113 = arith.mulf %112, %111 : vector<8x128xf32>
    %cst_60 = arith.constant 5.000000e-01 : f32
    %114 = vector.broadcast %cst_60 : f32 to vector<8x128xf32>
    %115 = arith.addf %113, %114 : vector<8x128xf32>
    %116 = vector.extract_strided_slice %101 {offsets = [0, 128], sizes = [8, 128], strides = [1, 1]} : vector<8x512xf32> to vector<8x128xf32>
    %cst_61 = arith.constant 5.000000e-01 : f32
    %117 = vector.broadcast %cst_61 : f32 to vector<8x128xf32>
    %118 = arith.mulf %117, %116 : vector<8x128xf32>
    %119 = math.tanh %118 : vector<8x128xf32>
    %cst_62 = arith.constant 5.000000e-01 : f32
    %120 = vector.broadcast %cst_62 : f32 to vector<8x128xf32>
    %121 = arith.mulf %120, %119 : vector<8x128xf32>
    %cst_63 = arith.constant 5.000000e-01 : f32
    %122 = vector.broadcast %cst_63 : f32 to vector<8x128xf32>
    %123 = arith.addf %121, %122 : vector<8x128xf32>
    %124 = vector.extract_strided_slice %101 {offsets = [0, 256], sizes = [8, 128], strides = [1, 1]} : vector<8x512xf32> to vector<8x128xf32>
    %125 = math.tanh %124 : vector<8x128xf32>
    %126 = vector.extract_strided_slice %101 {offsets = [0, 384], sizes = [8, 128], strides = [1, 1]} : vector<8x512xf32> to vector<8x128xf32>
    %cst_64 = arith.constant 5.000000e-01 : f32
    %127 = vector.broadcast %cst_64 : f32 to vector<8x128xf32>
    %128 = arith.mulf %127, %126 : vector<8x128xf32>
    %129 = math.tanh %128 : vector<8x128xf32>
    %cst_65 = arith.constant 5.000000e-01 : f32
    %130 = vector.broadcast %cst_65 : f32 to vector<8x128xf32>
    %131 = arith.mulf %130, %129 : vector<8x128xf32>
    %cst_66 = arith.constant 5.000000e-01 : f32
    %132 = vector.broadcast %cst_66 : f32 to vector<8x128xf32>
    %133 = arith.addf %131, %132 : vector<8x128xf32>
    %134 = arith.mulf %123, %107 : vector<8x128xf32>
    %135 = arith.mulf %115, %125 : vector<8x128xf32>
    %136 = arith.addf %134, %135 : vector<8x128xf32>
    %137 = math.tanh %136 : vector<8x128xf32>
    %138 = arith.mulf %133, %137 : vector<8x128xf32>
    %c0_67 = arith.constant 0 : index
    %c0_68 = arith.constant 0 : index
    %139 = vector.load %arg10[%c0_67, %c0_68] : memref<8x128xf32, #tpu.memory_space<vmem>>, vector<8x128xf32>
    %140 = vector.extract_strided_slice %106 {offsets = [0, 0], sizes = [8, 128], strides = [1, 1]} : vector<8x512xf32> to vector<8x128xf32>
    %cst_69 = arith.constant 5.000000e-01 : f32
    %141 = vector.broadcast %cst_69 : f32 to vector<8x128xf32>
    %142 = arith.mulf %141, %140 : vector<8x128xf32>
    %143 = math.tanh %142 : vector<8x128xf32>
    %cst_70 = arith.constant 5.000000e-01 : f32
    %144 = vector.broadcast %cst_70 : f32 to vector<8x128xf32>
    %145 = arith.mulf %144, %143 : vector<8x128xf32>
    %cst_71 = arith.constant 5.000000e-01 : f32
    %146 = vector.broadcast %cst_71 : f32 to vector<8x128xf32>
    %147 = arith.addf %145, %146 : vector<8x128xf32>
    %148 = vector.extract_strided_slice %106 {offsets = [0, 128], sizes = [8, 128], strides = [1, 1]} : vector<8x512xf32> to vector<8x128xf32>
    %cst_72 = arith.constant 5.000000e-01 : f32
    %149 = vector.broadcast %cst_72 : f32 to vector<8x128xf32>
    %150 = arith.mulf %149, %148 : vector<8x128xf32>
    %151 = math.tanh %150 : vector<8x128xf32>
    %cst_73 = arith.constant 5.000000e-01 : f32
    %152 = vector.broadcast %cst_73 : f32 to vector<8x128xf32>
    %153 = arith.mulf %152, %151 : vector<8x128xf32>
    %cst_74 = arith.constant 5.000000e-01 : f32
    %154 = vector.broadcast %cst_74 : f32 to vector<8x128xf32>
    %155 = arith.addf %153, %154 : vector<8x128xf32>
    %156 = vector.extract_strided_slice %106 {offsets = [0, 256], sizes = [8, 128], strides = [1, 1]} : vector<8x512xf32> to vector<8x128xf32>
    %157 = math.tanh %156 : vector<8x128xf32>
    %158 = vector.extract_strided_slice %106 {offsets = [0, 384], sizes = [8, 128], strides = [1, 1]} : vector<8x512xf32> to vector<8x128xf32>
    %cst_75 = arith.constant 5.000000e-01 : f32
    %159 = vector.broadcast %cst_75 : f32 to vector<8x128xf32>
    %160 = arith.mulf %159, %158 : vector<8x128xf32>
    %161 = math.tanh %160 : vector<8x128xf32>
    %cst_76 = arith.constant 5.000000e-01 : f32
    %162 = vector.broadcast %cst_76 : f32 to vector<8x128xf32>
    %163 = arith.mulf %162, %161 : vector<8x128xf32>
    %cst_77 = arith.constant 5.000000e-01 : f32
    %164 = vector.broadcast %cst_77 : f32 to vector<8x128xf32>
    %165 = arith.addf %163, %164 : vector<8x128xf32>
    %166 = arith.mulf %155, %139 : vector<8x128xf32>
    %167 = arith.mulf %147, %157 : vector<8x128xf32>
    %168 = arith.addf %166, %167 : vector<8x128xf32>
    %169 = math.tanh %168 : vector<8x128xf32>
    %170 = arith.mulf %165, %169 : vector<8x128xf32>
    %c0_78 = arith.constant 0 : index
    %c0_79 = arith.constant 0 : index
    %171 = vector.load %arg7[%c0_78, %c0_79] : memref<8x128xf32, #tpu.memory_space<vmem>>, vector<8x128xf32>
    tpu.vector_store %arg7[%c0_78, %c0_79], %138 {strides = array<i32>} : memref<8x128xf32, #tpu.memory_space<vmem>>, vector<8x128xf32>,
    %c0_80 = arith.constant 0 : index
    %c0_81 = arith.constant 0 : index
    %172 = vector.load %arg8[%c0_80, %c0_81] : memref<8x128xf32, #tpu.memory_space<vmem>>, vector<8x128xf32>
    tpu.vector_store %arg8[%c0_80, %c0_81], %136 {strides = array<i32>} : memref<8x128xf32, #tpu.memory_space<vmem>>, vector<8x128xf32>,
    %c0_82 = arith.constant 0 : index
    %c0_83 = arith.constant 0 : index
    %173 = vector.load %arg9[%c0_82, %c0_83] : memref<8x128xf32, #tpu.memory_space<vmem>>, vector<8x128xf32>
    tpu.vector_store %arg9[%c0_82, %c0_83], %170 {strides = array<i32>} : memref<8x128xf32, #tpu.memory_space<vmem>>, vector<8x128xf32>,
    %c0_84 = arith.constant 0 : index
    %c0_85 = arith.constant 0 : index
    %174 = vector.load %arg10[%c0_84, %c0_85] : memref<8x128xf32, #tpu.memory_space<vmem>>, vector<8x128xf32>
    tpu.vector_store %arg10[%c0_84, %c0_85], %168 {strides = array<i32>} : memref<8x128xf32, #tpu.memory_space<vmem>>, vector<8x128xf32>,
    %175 = arith.index_cast %93 : i32 to index
    %c0_86 = arith.constant 0 : index
    %176 = vector.load %arg5[%175, %c0_86] : memref<32x128xf32, #tpu.memory_space<vmem>>, vector<8x128xf32>
    tpu.vector_store %arg5[%175, %c0_86], %138 {strides = array<i32>} : memref<32x128xf32, #tpu.memory_space<vmem>>, vector<8x128xf32>,
    %177 = arith.index_cast %96 : i32 to index
    %c0_87 = arith.constant 0 : index
    %178 = vector.load %arg6[%177, %c0_87] : memref<32x128xf32, #tpu.memory_space<vmem>>, vector<8x128xf32>
    tpu.vector_store %arg6[%177, %c0_87], %170 {strides = array<i32>} : memref<32x128xf32, #tpu.memory_space<vmem>>, vector<8x128xf32>,
    %c2_i32 = arith.constant 2 : i32
    %c8_i32_88 = arith.constant 8 : i32
    %179 = arith.muli %c2_i32, %c8_i32_88 : i32
    %180 = tpu.assume_multiple %179, 8 : i32
    %c3_i32_89 = arith.constant 3 : i32
    %181 = arith.subi %c3_i32_89, %c2_i32 : i32
    %c8_i32_90 = arith.constant 8 : i32
    %182 = arith.muli %181, %c8_i32_90 : i32
    %183 = tpu.assume_multiple %182, 8 : i32
    %184 = arith.index_cast %180 : i32 to index
    %c0_91 = arith.constant 0 : index
    %185 = vector.load %arg1[%184, %c0_91] : memref<32x512xf32, #tpu.memory_space<vmem>>, vector<8x512xf32>
    %c0_92 = arith.constant 0 : index
    %c0_93 = arith.constant 0 : index
    %186 = vector.load %arg7[%c0_92, %c0_93] : memref<8x128xf32, #tpu.memory_space<vmem>>, vector<8x128xf32>
    %cst_94 = arith.constant dense<0.000000e+00> : vector<8x512xf32>
    %187 = tpu.matmul %186, %3, %cst_94 {dimension_numbers = #tpu.dot_dimension_numbers<[1], [0], [0], [1], [0, 0, 1, 1], [], []>} : vector<8x128xf32>, vector<128x512xf32>, vector<8x512xf32> -> vector<8x512xf32>
    %188 = arith.addf %185, %187 : vector<8x512xf32>
    %189 = arith.index_cast %183 : i32 to index
    %c0_95 = arith.constant 0 : index
    %190 = vector.load %arg2[%189, %c0_95] : memref<32x512xf32, #tpu.memory_space<vmem>>, vector<8x512xf32>
    %c0_96 = arith.constant 0 : index
    %c0_97 = arith.constant 0 : index
    %191 = vector.load %arg9[%c0_96, %c0_97] : memref<8x128xf32, #tpu.memory_space<vmem>>, vector<8x128xf32>
    %cst_98 = arith.constant dense<0.000000e+00> : vector<8x512xf32>
    %192 = tpu.matmul %191, %4, %cst_98 {dimension_numbers = #tpu.dot_dimension_numbers<[1], [0], [0], [1], [0, 0, 1, 1], [], []>} : vector<8x128xf32>, vector<128x512xf32>, vector<8x512xf32> -> vector<8x512xf32>
    %193 = arith.addf %190, %192 : vector<8x512xf32>
    %c0_99 = arith.constant 0 : index
    %c0_100 = arith.constant 0 : index
    %194 = vector.load %arg8[%c0_99, %c0_100] : memref<8x128xf32, #tpu.memory_space<vmem>>, vector<8x128xf32>
    %195 = vector.extract_strided_slice %188 {offsets = [0, 0], sizes = [8, 128], strides = [1, 1]} : vector<8x512xf32> to vector<8x128xf32>
    %cst_101 = arith.constant 5.000000e-01 : f32
    %196 = vector.broadcast %cst_101 : f32 to vector<8x128xf32>
    %197 = arith.mulf %196, %195 : vector<8x128xf32>
    %198 = math.tanh %197 : vector<8x128xf32>
    %cst_102 = arith.constant 5.000000e-01 : f32
    %199 = vector.broadcast %cst_102 : f32 to vector<8x128xf32>
    %200 = arith.mulf %199, %198 : vector<8x128xf32>
    %cst_103 = arith.constant 5.000000e-01 : f32
    %201 = vector.broadcast %cst_103 : f32 to vector<8x128xf32>
    %202 = arith.addf %200, %201 : vector<8x128xf32>
    %203 = vector.extract_strided_slice %188 {offsets = [0, 128], sizes = [8, 128], strides = [1, 1]} : vector<8x512xf32> to vector<8x128xf32>
    %cst_104 = arith.constant 5.000000e-01 : f32
    %204 = vector.broadcast %cst_104 : f32 to vector<8x128xf32>
    %205 = arith.mulf %204, %203 : vector<8x128xf32>
    %206 = math.tanh %205 : vector<8x128xf32>
    %cst_105 = arith.constant 5.000000e-01 : f32
    %207 = vector.broadcast %cst_105 : f32 to vector<8x128xf32>
    %208 = arith.mulf %207, %206 : vector<8x128xf32>
    %cst_106 = arith.constant 5.000000e-01 : f32
    %209 = vector.broadcast %cst_106 : f32 to vector<8x128xf32>
    %210 = arith.addf %208, %209 : vector<8x128xf32>
    %211 = vector.extract_strided_slice %188 {offsets = [0, 256], sizes = [8, 128], strides = [1, 1]} : vector<8x512xf32> to vector<8x128xf32>
    %212 = math.tanh %211 : vector<8x128xf32>
    %213 = vector.extract_strided_slice %188 {offsets = [0, 384], sizes = [8, 128], strides = [1, 1]} : vector<8x512xf32> to vector<8x128xf32>
    %cst_107 = arith.constant 5.000000e-01 : f32
    %214 = vector.broadcast %cst_107 : f32 to vector<8x128xf32>
    %215 = arith.mulf %214, %213 : vector<8x128xf32>
    %216 = math.tanh %215 : vector<8x128xf32>
    %cst_108 = arith.constant 5.000000e-01 : f32
    %217 = vector.broadcast %cst_108 : f32 to vector<8x128xf32>
    %218 = arith.mulf %217, %216 : vector<8x128xf32>
    %cst_109 = arith.constant 5.000000e-01 : f32
    %219 = vector.broadcast %cst_109 : f32 to vector<8x128xf32>
    %220 = arith.addf %218, %219 : vector<8x128xf32>
    %221 = arith.mulf %210, %194 : vector<8x128xf32>
    %222 = arith.mulf %202, %212 : vector<8x128xf32>
    %223 = arith.addf %221, %222 : vector<8x128xf32>
    %224 = math.tanh %223 : vector<8x128xf32>
    %225 = arith.mulf %220, %224 : vector<8x128xf32>
    %c0_110 = arith.constant 0 : index
    %c0_111 = arith.constant 0 : index
    %226 = vector.load %arg10[%c0_110, %c0_111] : memref<8x128xf32, #tpu.memory_space<vmem>>, vector<8x128xf32>
    %227 = vector.extract_strided_slice %193 {offsets = [0, 0], sizes = [8, 128], strides = [1, 1]} : vector<8x512xf32> to vector<8x128xf32>
    %cst_112 = arith.constant 5.000000e-01 : f32
    %228 = vector.broadcast %cst_112 : f32 to vector<8x128xf32>
    %229 = arith.mulf %228, %227 : vector<8x128xf32>
    %230 = math.tanh %229 : vector<8x128xf32>
    %cst_113 = arith.constant 5.000000e-01 : f32
    %231 = vector.broadcast %cst_113 : f32 to vector<8x128xf32>
    %232 = arith.mulf %231, %230 : vector<8x128xf32>
    %cst_114 = arith.constant 5.000000e-01 : f32
    %233 = vector.broadcast %cst_114 : f32 to vector<8x128xf32>
    %234 = arith.addf %232, %233 : vector<8x128xf32>
    %235 = vector.extract_strided_slice %193 {offsets = [0, 128], sizes = [8, 128], strides = [1, 1]} : vector<8x512xf32> to vector<8x128xf32>
    %cst_115 = arith.constant 5.000000e-01 : f32
    %236 = vector.broadcast %cst_115 : f32 to vector<8x128xf32>
    %237 = arith.mulf %236, %235 : vector<8x128xf32>
    %238 = math.tanh %237 : vector<8x128xf32>
    %cst_116 = arith.constant 5.000000e-01 : f32
    %239 = vector.broadcast %cst_116 : f32 to vector<8x128xf32>
    %240 = arith.mulf %239, %238 : vector<8x128xf32>
    %cst_117 = arith.constant 5.000000e-01 : f32
    %241 = vector.broadcast %cst_117 : f32 to vector<8x128xf32>
    %242 = arith.addf %240, %241 : vector<8x128xf32>
    %243 = vector.extract_strided_slice %193 {offsets = [0, 256], sizes = [8, 128], strides = [1, 1]} : vector<8x512xf32> to vector<8x128xf32>
    %244 = math.tanh %243 : vector<8x128xf32>
    %245 = vector.extract_strided_slice %193 {offsets = [0, 384], sizes = [8, 128], strides = [1, 1]} : vector<8x512xf32> to vector<8x128xf32>
    %cst_118 = arith.constant 5.000000e-01 : f32
    %246 = vector.broadcast %cst_118 : f32 to vector<8x128xf32>
    %247 = arith.mulf %246, %245 : vector<8x128xf32>
    %248 = math.tanh %247 : vector<8x128xf32>
    %cst_119 = arith.constant 5.000000e-01 : f32
    %249 = vector.broadcast %cst_119 : f32 to vector<8x128xf32>
    %250 = arith.mulf %249, %248 : vector<8x128xf32>
    %cst_120 = arith.constant 5.000000e-01 : f32
    %251 = vector.broadcast %cst_120 : f32 to vector<8x128xf32>
    %252 = arith.addf %250, %251 : vector<8x128xf32>
    %253 = arith.mulf %242, %226 : vector<8x128xf32>
    %254 = arith.mulf %234, %244 : vector<8x128xf32>
    %255 = arith.addf %253, %254 : vector<8x128xf32>
    %256 = math.tanh %255 : vector<8x128xf32>
    %257 = arith.mulf %252, %256 : vector<8x128xf32>
    %c0_121 = arith.constant 0 : index
    %c0_122 = arith.constant 0 : index
    %258 = vector.load %arg7[%c0_121, %c0_122] : memref<8x128xf32, #tpu.memory_space<vmem>>, vector<8x128xf32>
    tpu.vector_store %arg7[%c0_121, %c0_122], %225 {strides = array<i32>} : memref<8x128xf32, #tpu.memory_space<vmem>>, vector<8x128xf32>,
    %c0_123 = arith.constant 0 : index
    %c0_124 = arith.constant 0 : index
    %259 = vector.load %arg8[%c0_123, %c0_124] : memref<8x128xf32, #tpu.memory_space<vmem>>, vector<8x128xf32>
    tpu.vector_store %arg8[%c0_123, %c0_124], %223 {strides = array<i32>} : memref<8x128xf32, #tpu.memory_space<vmem>>, vector<8x128xf32>,
    %c0_125 = arith.constant 0 : index
    %c0_126 = arith.constant 0 : index
    %260 = vector.load %arg9[%c0_125, %c0_126] : memref<8x128xf32, #tpu.memory_space<vmem>>, vector<8x128xf32>
    tpu.vector_store %arg9[%c0_125, %c0_126], %257 {strides = array<i32>} : memref<8x128xf32, #tpu.memory_space<vmem>>, vector<8x128xf32>,
    %c0_127 = arith.constant 0 : index
    %c0_128 = arith.constant 0 : index
    %261 = vector.load %arg10[%c0_127, %c0_128] : memref<8x128xf32, #tpu.memory_space<vmem>>, vector<8x128xf32>
    tpu.vector_store %arg10[%c0_127, %c0_128], %255 {strides = array<i32>} : memref<8x128xf32, #tpu.memory_space<vmem>>, vector<8x128xf32>,
    %262 = arith.index_cast %180 : i32 to index
    %c0_129 = arith.constant 0 : index
    %263 = vector.load %arg5[%262, %c0_129] : memref<32x128xf32, #tpu.memory_space<vmem>>, vector<8x128xf32>
    tpu.vector_store %arg5[%262, %c0_129], %225 {strides = array<i32>} : memref<32x128xf32, #tpu.memory_space<vmem>>, vector<8x128xf32>,
    %264 = arith.index_cast %183 : i32 to index
    %c0_130 = arith.constant 0 : index
    %265 = vector.load %arg6[%264, %c0_130] : memref<32x128xf32, #tpu.memory_space<vmem>>, vector<8x128xf32>
    tpu.vector_store %arg6[%264, %c0_130], %257 {strides = array<i32>} : memref<32x128xf32, #tpu.memory_space<vmem>>, vector<8x128xf32>,
    %c3_i32_131 = arith.constant 3 : i32
    %c8_i32_132 = arith.constant 8 : i32
    %266 = arith.muli %c3_i32_131, %c8_i32_132 : i32
    %267 = tpu.assume_multiple %266, 8 : i32
    %c3_i32_133 = arith.constant 3 : i32
    %268 = arith.subi %c3_i32_133, %c3_i32_131 : i32
    %c8_i32_134 = arith.constant 8 : i32
    %269 = arith.muli %268, %c8_i32_134 : i32
    %270 = tpu.assume_multiple %269, 8 : i32
    %271 = arith.index_cast %267 : i32 to index
    %c0_135 = arith.constant 0 : index
    %272 = vector.load %arg1[%271, %c0_135] : memref<32x512xf32, #tpu.memory_space<vmem>>, vector<8x512xf32>
    %c0_136 = arith.constant 0 : index
    %c0_137 = arith.constant 0 : index
    %273 = vector.load %arg7[%c0_136, %c0_137] : memref<8x128xf32, #tpu.memory_space<vmem>>, vector<8x128xf32>
    %cst_138 = arith.constant dense<0.000000e+00> : vector<8x512xf32>
    %274 = tpu.matmul %273, %3, %cst_138 {dimension_numbers = #tpu.dot_dimension_numbers<[1], [0], [0], [1], [0, 0, 1, 1], [], []>} : vector<8x128xf32>, vector<128x512xf32>, vector<8x512xf32> -> vector<8x512xf32>
    %275 = arith.addf %272, %274 : vector<8x512xf32>
    %276 = arith.index_cast %270 : i32 to index
    %c0_139 = arith.constant 0 : index
    %277 = vector.load %arg2[%276, %c0_139] : memref<32x512xf32, #tpu.memory_space<vmem>>, vector<8x512xf32>
    %c0_140 = arith.constant 0 : index
    %c0_141 = arith.constant 0 : index
    %278 = vector.load %arg9[%c0_140, %c0_141] : memref<8x128xf32, #tpu.memory_space<vmem>>, vector<8x128xf32>
    %cst_142 = arith.constant dense<0.000000e+00> : vector<8x512xf32>
    %279 = tpu.matmul %278, %4, %cst_142 {dimension_numbers = #tpu.dot_dimension_numbers<[1], [0], [0], [1], [0, 0, 1, 1], [], []>} : vector<8x128xf32>, vector<128x512xf32>, vector<8x512xf32> -> vector<8x512xf32>
    %280 = arith.addf %277, %279 : vector<8x512xf32>
    %c0_143 = arith.constant 0 : index
    %c0_144 = arith.constant 0 : index
    %281 = vector.load %arg8[%c0_143, %c0_144] : memref<8x128xf32, #tpu.memory_space<vmem>>, vector<8x128xf32>
    %282 = vector.extract_strided_slice %275 {offsets = [0, 0], sizes = [8, 128], strides = [1, 1]} : vector<8x512xf32> to vector<8x128xf32>
    %cst_145 = arith.constant 5.000000e-01 : f32
    %283 = vector.broadcast %cst_145 : f32 to vector<8x128xf32>
    %284 = arith.mulf %283, %282 : vector<8x128xf32>
    %285 = math.tanh %284 : vector<8x128xf32>
    %cst_146 = arith.constant 5.000000e-01 : f32
    %286 = vector.broadcast %cst_146 : f32 to vector<8x128xf32>
    %287 = arith.mulf %286, %285 : vector<8x128xf32>
    %cst_147 = arith.constant 5.000000e-01 : f32
    %288 = vector.broadcast %cst_147 : f32 to vector<8x128xf32>
    %289 = arith.addf %287, %288 : vector<8x128xf32>
    %290 = vector.extract_strided_slice %275 {offsets = [0, 128], sizes = [8, 128], strides = [1, 1]} : vector<8x512xf32> to vector<8x128xf32>
    %cst_148 = arith.constant 5.000000e-01 : f32
    %291 = vector.broadcast %cst_148 : f32 to vector<8x128xf32>
    %292 = arith.mulf %291, %290 : vector<8x128xf32>
    %293 = math.tanh %292 : vector<8x128xf32>
    %cst_149 = arith.constant 5.000000e-01 : f32
    %294 = vector.broadcast %cst_149 : f32 to vector<8x128xf32>
    %295 = arith.mulf %294, %293 : vector<8x128xf32>
    %cst_150 = arith.constant 5.000000e-01 : f32
    %296 = vector.broadcast %cst_150 : f32 to vector<8x128xf32>
    %297 = arith.addf %295, %296 : vector<8x128xf32>
    %298 = vector.extract_strided_slice %275 {offsets = [0, 256], sizes = [8, 128], strides = [1, 1]} : vector<8x512xf32> to vector<8x128xf32>
    %299 = math.tanh %298 : vector<8x128xf32>
    %300 = vector.extract_strided_slice %275 {offsets = [0, 384], sizes = [8, 128], strides = [1, 1]} : vector<8x512xf32> to vector<8x128xf32>
    %cst_151 = arith.constant 5.000000e-01 : f32
    %301 = vector.broadcast %cst_151 : f32 to vector<8x128xf32>
    %302 = arith.mulf %301, %300 : vector<8x128xf32>
    %303 = math.tanh %302 : vector<8x128xf32>
    %cst_152 = arith.constant 5.000000e-01 : f32
    %304 = vector.broadcast %cst_152 : f32 to vector<8x128xf32>
    %305 = arith.mulf %304, %303 : vector<8x128xf32>
    %cst_153 = arith.constant 5.000000e-01 : f32
    %306 = vector.broadcast %cst_153 : f32 to vector<8x128xf32>
    %307 = arith.addf %305, %306 : vector<8x128xf32>
    %308 = arith.mulf %297, %281 : vector<8x128xf32>
    %309 = arith.mulf %289, %299 : vector<8x128xf32>
    %310 = arith.addf %308, %309 : vector<8x128xf32>
    %311 = math.tanh %310 : vector<8x128xf32>
    %312 = arith.mulf %307, %311 : vector<8x128xf32>
    %c0_154 = arith.constant 0 : index
    %c0_155 = arith.constant 0 : index
    %313 = vector.load %arg10[%c0_154, %c0_155] : memref<8x128xf32, #tpu.memory_space<vmem>>, vector<8x128xf32>
    %314 = vector.extract_strided_slice %280 {offsets = [0, 0], sizes = [8, 128], strides = [1, 1]} : vector<8x512xf32> to vector<8x128xf32>
    %cst_156 = arith.constant 5.000000e-01 : f32
    %315 = vector.broadcast %cst_156 : f32 to vector<8x128xf32>
    %316 = arith.mulf %315, %314 : vector<8x128xf32>
    %317 = math.tanh %316 : vector<8x128xf32>
    %cst_157 = arith.constant 5.000000e-01 : f32
    %318 = vector.broadcast %cst_157 : f32 to vector<8x128xf32>
    %319 = arith.mulf %318, %317 : vector<8x128xf32>
    %cst_158 = arith.constant 5.000000e-01 : f32
    %320 = vector.broadcast %cst_158 : f32 to vector<8x128xf32>
    %321 = arith.addf %319, %320 : vector<8x128xf32>
    %322 = vector.extract_strided_slice %280 {offsets = [0, 128], sizes = [8, 128], strides = [1, 1]} : vector<8x512xf32> to vector<8x128xf32>
    %cst_159 = arith.constant 5.000000e-01 : f32
    %323 = vector.broadcast %cst_159 : f32 to vector<8x128xf32>
    %324 = arith.mulf %323, %322 : vector<8x128xf32>
    %325 = math.tanh %324 : vector<8x128xf32>
    %cst_160 = arith.constant 5.000000e-01 : f32
    %326 = vector.broadcast %cst_160 : f32 to vector<8x128xf32>
    %327 = arith.mulf %326, %325 : vector<8x128xf32>
    %cst_161 = arith.constant 5.000000e-01 : f32
    %328 = vector.broadcast %cst_161 : f32 to vector<8x128xf32>
    %329 = arith.addf %327, %328 : vector<8x128xf32>
    %330 = vector.extract_strided_slice %280 {offsets = [0, 256], sizes = [8, 128], strides = [1, 1]} : vector<8x512xf32> to vector<8x128xf32>
    %331 = math.tanh %330 : vector<8x128xf32>
    %332 = vector.extract_strided_slice %280 {offsets = [0, 384], sizes = [8, 128], strides = [1, 1]} : vector<8x512xf32> to vector<8x128xf32>
    %cst_162 = arith.constant 5.000000e-01 : f32
    %333 = vector.broadcast %cst_162 : f32 to vector<8x128xf32>
    %334 = arith.mulf %333, %332 : vector<8x128xf32>
    %335 = math.tanh %334 : vector<8x128xf32>
    %cst_163 = arith.constant 5.000000e-01 : f32
    %336 = vector.broadcast %cst_163 : f32 to vector<8x128xf32>
    %337 = arith.mulf %336, %335 : vector<8x128xf32>
    %cst_164 = arith.constant 5.000000e-01 : f32
    %338 = vector.broadcast %cst_164 : f32 to vector<8x128xf32>
    %339 = arith.addf %337, %338 : vector<8x128xf32>
    %340 = arith.mulf %329, %313 : vector<8x128xf32>
    %341 = arith.mulf %321, %331 : vector<8x128xf32>
    %342 = arith.addf %340, %341 : vector<8x128xf32>
    %343 = math.tanh %342 : vector<8x128xf32>
    %344 = arith.mulf %339, %343 : vector<8x128xf32>
    %c0_165 = arith.constant 0 : index
    %c0_166 = arith.constant 0 : index
    %345 = vector.load %arg7[%c0_165, %c0_166] : memref<8x128xf32, #tpu.memory_space<vmem>>, vector<8x128xf32>
    tpu.vector_store %arg7[%c0_165, %c0_166], %312 {strides = array<i32>} : memref<8x128xf32, #tpu.memory_space<vmem>>, vector<8x128xf32>,
    %c0_167 = arith.constant 0 : index
    %c0_168 = arith.constant 0 : index
    %346 = vector.load %arg8[%c0_167, %c0_168] : memref<8x128xf32, #tpu.memory_space<vmem>>, vector<8x128xf32>
    tpu.vector_store %arg8[%c0_167, %c0_168], %310 {strides = array<i32>} : memref<8x128xf32, #tpu.memory_space<vmem>>, vector<8x128xf32>,
    %c0_169 = arith.constant 0 : index
    %c0_170 = arith.constant 0 : index
    %347 = vector.load %arg9[%c0_169, %c0_170] : memref<8x128xf32, #tpu.memory_space<vmem>>, vector<8x128xf32>
    tpu.vector_store %arg9[%c0_169, %c0_170], %344 {strides = array<i32>} : memref<8x128xf32, #tpu.memory_space<vmem>>, vector<8x128xf32>,
    %c0_171 = arith.constant 0 : index
    %c0_172 = arith.constant 0 : index
    %348 = vector.load %arg10[%c0_171, %c0_172] : memref<8x128xf32, #tpu.memory_space<vmem>>, vector<8x128xf32>
    tpu.vector_store %arg10[%c0_171, %c0_172], %342 {strides = array<i32>} : memref<8x128xf32, #tpu.memory_space<vmem>>, vector<8x128xf32>,
    %349 = arith.index_cast %267 : i32 to index
    %c0_173 = arith.constant 0 : index
    %350 = vector.load %arg5[%349, %c0_173] : memref<32x128xf32, #tpu.memory_space<vmem>>, vector<8x128xf32>
    tpu.vector_store %arg5[%349, %c0_173], %312 {strides = array<i32>} : memref<32x128xf32, #tpu.memory_space<vmem>>, vector<8x128xf32>,
    %351 = arith.index_cast %270 : i32 to index
    %c0_174 = arith.constant 0 : index
    %352 = vector.load %arg6[%351, %c0_174] : memref<32x128xf32, #tpu.memory_space<vmem>>, vector<8x128xf32>
    tpu.vector_store %arg6[%351, %c0_174], %344 {strides = array<i32>} : memref<32x128xf32, #tpu.memory_space<vmem>>, vector<8x128xf32>,
    %c4_i32 = arith.constant 4 : i32
    return
  }
  func.func @transform_0(%arg0: i32) -> (i32, i32) {
    %c0_i32 = arith.constant 0 : i32
    %c0_i32_0 = arith.constant 0 : i32
    return %arg0, %c0_i32 : i32, i32
  }
  func.func @transform_1(%arg0: i32) -> (i32, i32) {
    %c1_i32 = arith.constant 1 : i32
    %0 = arith.subi %c1_i32, %arg0 : i32
    %c0_i32 = arith.constant 0 : i32
    %c0_i32_0 = arith.constant 0 : i32
    return %0, %c0_i32 : i32, i32
  }
  func.func @transform_2(%arg0: i32) -> (i32, i32) {
    %c0_i32 = arith.constant 0 : i32
    %c0_i32_0 = arith.constant 0 : i32
    %c0_i32_1 = arith.constant 0 : i32
    return %c0_i32, %c0_i32_0 : i32, i32
  }
  func.func @transform_3(%arg0: i32) -> (i32, i32) {
    %c0_i32 = arith.constant 0 : i32
    %c0_i32_0 = arith.constant 0 : i32
    %c0_i32_1 = arith.constant 0 : i32
    return %c0_i32, %c0_i32_0 : i32, i32
  }
  func.func @transform_4(%arg0: i32) -> (i32, i32) {
    %c0_i32 = arith.constant 0 : i32
    %c0_i32_0 = arith.constant 0 : i32
    return %arg0, %c0_i32 : i32, i32
  }
  func.func @transform_5(%arg0: i32) -> (i32, i32) {
    %c1_i32 = arith.constant 1 : i32
    %0 = arith.subi %c1_i32, %arg0 : i32
    %c0_i32 = arith.constant 0 : i32
    %c0_i32_0 = arith.constant 0 : i32
    return %0, %c0_i32 : i32, i32
  }
}

</mosaic_0001>

<llo_original>
// kernel: bidirectional_lstm.1
$region0: #{bidirectional_lstm.1}
  #allocation0 [shape = 'u32[]', space=smem, size = 0x4, offset = 0x4, fixed_abs, tag = 'smem constant byte address 0x4 - core index']
  #allocation1 [shape = 'u32[144,128]{1,0:T(1,128)}', space=vmem, size = 0x12000, scoped, tag = 'internal scratch']
  #allocation2 [shape = 'f32[8,128]{1,0:T(8,128)}', space=vmem, size = 0x1000, scoped, tag = 'scratch operand']
  #allocation3 [shape = 'f32[8,128]{1,0:T(8,128)}', space=vmem, size = 0x1000, scoped, tag = 'scratch operand']
  #allocation4 [shape = 'f32[8,128]{1,0:T(8,128)}', space=vmem, size = 0x1000, scoped, tag = 'scratch operand']
  #allocation5 [shape = 'f32[8,128]{1,0:T(8,128)}', space=vmem, size = 0x1000, scoped, tag = 'scratch operand']
  %s0 = inlined_call_operand.vmem [shape: f32[64,512], index: 0, kind: input, shape index: {}]
  %s1 = inlined_call_operand.vmem [shape: f32[64,512], index: 1, kind: input, shape index: {}]
  %s2 = inlined_call_operand.vmem [shape: f32[128,512], index: 2, kind: input, shape index: {}]
  %s3 = inlined_call_operand.vmem [shape: f32[128,512], index: 3, kind: input, shape index: {}]
  %s4 = inlined_call_operand.vmem [shape: f32[64,128], index: 4, kind: output, shape index: {0}]
  %s5 = inlined_call_operand.vmem [shape: f32[64,128], index: 5, kind: output, shape index: {1}]
  %6 = xla_tuple %s4, %s5
  %s7 = sld [smem:[#allocation0]]
  $region61: #{bidirectional_lstm.1} parent=0
    _
  %s9 = ssub.s32 1, %s7
  %s10 = scalar_select 0, %s9, %s7
  loop: start=0, step=1, limit=4
  $region2: #{bidirectional_lstm.1} parent=0 // loop_pre_header
    _
  $region3: #{bidirectional_lstm.1} parent=0 // loop_header
    %s12 = sphi 0, %s16
    %p13 = scmp.ge.s32.totalorder %s12, 4
    %s22 = sphi 0, %s24
    %s25 = sphi 0, %s22
    %s26 = sphi 0, %s25
    %s42 = sphi 0, %s26
    %s50 = sphi 0, %s52
    %s53 = sphi 0, %s50
    %s54 = sphi 0, %s53
    %s70 = sphi 0, %s54
    %s74 = sphi 0, %s74
    %s76 = sphi 0, %s74
    %s77 = sphi 0, %s76
    %s91 = sphi 0, %s77
    %s95 = sphi 0, %s95
    %s97 = sphi 0, %s95
    %s98 = sphi 0, %s97
    %s112 = sphi 0, %s98
    %s118 = sphi 0, %s120
    %s121 = sphi 0, %s118
    %s122 = sphi 0, %s121
    %s138 = sphi 0, %s122
    %s146 = sphi 0, %s148
    %s149 = sphi 0, %s146
    %s150 = sphi 0, %s149
    %s166 = sphi 0, %s150
  $region4: #{bidirectional_lstm.1} parent=0 // loop_header_branch
    %15 = sbr.rel (%p13) target = $region8
  $region5: #{bidirectional_lstm.1} parent=0 // loop_body
    %s17 = ssub.s32 %s12, 1
    %s18 = ssub.s32 %s12, 2
    %s19 = sadd.s32 %s12, 1
    %s20 = ssub.s32 %s12, %s19
    %p21 = scmp.eq.s32.totalorder %s20, 0
    %s23 = sadd.s32 %s22, 1
    %s24 = scalar_select %p21, %s22, %s23
    %p27 = pneg %p21
    %p28 = scmp.eq.s32.totalorder %s12, 1
    %p29 = por %p27, %p28
    %p30 = scmp.ne.s32.totalorder %s22, %s25
    %p31 = scmp.eq.s32.totalorder %s12, 0
    %p32 = por %p30, %p31
    %p33 = scmp.ne.s32.totalorder %s22, %s25
    %p34 = scmp.eq.s32.totalorder %s17, 1
    %p35 = por %p33, %p34
    %p36 = scmp.ne.s32.totalorder %s25, %s26
    %p37 = scmp.eq.s32.totalorder %s17, 0
    %p38 = por %p36, %p37
    %p39 = scmp.ne.s32.totalorder %s25, %s26
    %p40 = scmp.eq.s32.totalorder %s18, 1
    %p41 = por %p39, %p40
    %p43 = scmp.ne.s32.totalorder %s26, %s42
    %p44 = scmp.eq.s32.totalorder %s18, 0
    %p45 = por %p43, %p44
    %s46 = ssub.s32 1, %s12
    %s47 = ssub.s32 1, %s19
    %s48 = ssub.s32 %s46, %s47
    %p49 = scmp.eq.s32.totalorder %s48, 0
    %s51 = sadd.s32 %s50, 1
    %s52 = scalar_select %p49, %s50, %s51
    %p55 = pneg %p49
    %p56 = scmp.eq.s32.totalorder %s12, 1
    %p57 = por %p55, %p56
    %p58 = scmp.ne.s32.totalorder %s50, %s53
    %p59 = scmp.eq.s32.totalorder %s12, 0
    %p60 = por %p58, %p59
    %p61 = scmp.ne.s32.totalorder %s50, %s53
    %p62 = scmp.eq.s32.totalorder %s17, 1
    %p63 = por %p61, %p62
    %p64 = scmp.ne.s32.totalorder %s53, %s54
    %p65 = scmp.eq.s32.totalorder %s17, 0
    %p66 = por %p64, %p65
    %p67 = scmp.ne.s32.totalorder %s53, %s54
    %p68 = scmp.eq.s32.totalorder %s18, 1
    %p69 = por %p67, %p68
    %p71 = scmp.ne.s32.totalorder %s54, %s70
    %p72 = scmp.eq.s32.totalorder %s18, 0
    %p73 = por %p71, %p72
    %s75 = sadd.s32 %s74, 1
    %p78 = scmp.eq.s32.totalorder %s12, 1
    %p79 = scmp.ne.s32.totalorder %s74, %s76
    %p80 = scmp.eq.s32.totalorder %s12, 0
    %p81 = por %p79, %p80
    %p82 = scmp.ne.s32.totalorder %s74, %s76
    %p83 = scmp.eq.s32.totalorder %s17, 1
    %p84 = por %p82, %p83
    %p85 = scmp.ne.s32.totalorder %s76, %s77
    %p86 = scmp.eq.s32.totalorder %s17, 0
    %p87 = por %p85, %p86
    %p88 = scmp.ne.s32.totalorder %s76, %s77
    %p89 = scmp.eq.s32.totalorder %s18, 1
    %p90 = por %p88, %p89
    %p92 = scmp.ne.s32.totalorder %s77, %s91
    %p93 = scmp.eq.s32.totalorder %s18, 0
    %p94 = por %p92, %p93
    %s96 = sadd.s32 %s95, 1
    %p99 = scmp.eq.s32.totalorder %s12, 1
    %p100 = scmp.ne.s32.totalorder %s95, %s97
    %p101 = scmp.eq.s32.totalorder %s12, 0
    %p102 = por %p100, %p101
    %p103 = scmp.ne.s32.totalorder %s95, %s97
    %p104 = scmp.eq.s32.totalorder %s17, 1
    %p105 = por %p103, %p104
    %p106 = scmp.ne.s32.totalorder %s97, %s98
    %p107 = scmp.eq.s32.totalorder %s17, 0
    %p108 = por %p106, %p107
    %p109 = scmp.ne.s32.totalorder %s97, %s98
    %p110 = scmp.eq.s32.totalorder %s18, 1
    %p111 = por %p109, %p110
    %p113 = scmp.ne.s32.totalorder %s98, %s112
    %p114 = scmp.eq.s32.totalorder %s18, 0
    %p115 = por %p113, %p114
    %s116 = ssub.s32 %s12, %s19
    %p117 = scmp.eq.s32.totalorder %s116, 0
    %s119 = sadd.s32 %s118, 1
    %s120 = scalar_select %p117, %s118, %s119
    %p123 = pneg %p117
    %p124 = scmp.eq.s32.totalorder %s12, 1
    %p125 = por %p123, %p124
    %p126 = scmp.ne.s32.totalorder %s118, %s121
    %p127 = scmp.eq.s32.totalorder %s12, 0
    %p128 = por %p126, %p127
    %p129 = scmp.ne.s32.totalorder %s118, %s121
    %p130 = scmp.eq.s32.totalorder %s17, 1
    %p131 = por %p129, %p130
    %p132 = scmp.ne.s32.totalorder %s121, %s122
    %p133 = scmp.eq.s32.totalorder %s17, 0
    %p134 = por %p132, %p133
    %p135 = scmp.ne.s32.totalorder %s121, %s122
    %p136 = scmp.eq.s32.totalorder %s18, 1
    %p137 = por %p135, %p136
    %p139 = scmp.ne.s32.totalorder %s122, %s138
    %p140 = scmp.eq.s32.totalorder %s18, 0
    %p141 = por %p139, %p140
    %s142 = ssub.s32 1, %s12
    %s143 = ssub.s32 1, %s19
    %s144 = ssub.s32 %s142, %s143
    %p145 = scmp.eq.s32.totalorder %s144, 0
    %s147 = sadd.s32 %s146, 1
    %s148 = scalar_select %p145, %s146, %s147
    %p151 = pneg %p145
    %p152 = scmp.eq.s32.totalorder %s12, 1
    %p153 = por %p151, %p152
    %p154 = scmp.ne.s32.totalorder %s146, %s149
    %p155 = scmp.eq.s32.totalorder %s12, 0
    %p156 = por %p154, %p155
    %p157 = scmp.ne.s32.totalorder %s146, %s149
    %p158 = scmp.eq.s32.totalorder %s17, 1
    %p159 = por %p157, %p158
    %p160 = scmp.ne.s32.totalorder %s149, %s150
    %p161 = scmp.eq.s32.totalorder %s17, 0
    %p162 = por %p160, %p161
    %p163 = scmp.ne.s32.totalorder %s149, %s150
    %p164 = scmp.eq.s32.totalorder %s18, 1
    %p165 = por %p163, %p164
    %p167 = scmp.ne.s32.totalorder %s150, %s166
    %p168 = scmp.eq.s32.totalorder %s18, 0
    %p169 = por %p167, %p168
    %p170 = scmp.le.s32.totalorder 1, %s12
    %p171 = scmp.lt.s32.totalorder %s12, 3
    %p172 = pnand %p170, %p171
    %p173 = pneg %p172
    // Predicated region
    $region9: #{bidirectional_lstm.1} parent=5 // pred_check
      _
    $region10: #{bidirectional_lstm.1} parent=5 // pred_check_branch
      %175 = sbr.rel (%p172) target = $region12
    $region11: #{bidirectional_lstm.1} parent=5 // pred_region
      %s176 = ssub.s32 %s12, 1
      // Predicated region
      $region13: #{bidirectional_lstm.1} parent=11 // pred_check
        %p177 = pneg %p87
      $region14: #{bidirectional_lstm.1} parent=11 // pred_check_branch
        %179 = sbr.rel (%p177) target = $region16
      $region15: #{bidirectional_lstm.1} parent=11 // pred_region
        _
      $region16: #{bidirectional_lstm.1} parent=11 // pred_fallthru
        _
      // Predicated region
      $region17: #{bidirectional_lstm.1} parent=11 // pred_check
        %p180 = pneg %p108
      $region18: #{bidirectional_lstm.1} parent=11 // pred_check_branch
        %182 = sbr.rel (%p180) target = $region20
      $region19: #{bidirectional_lstm.1} parent=11 // pred_region
        _
      $region20: #{bidirectional_lstm.1} parent=11 // pred_fallthru
        _
    $region12: #{bidirectional_lstm.1} parent=5 // pred_fallthru
      _
    %p183 = scmp.lt.s32.totalorder %s12, 2
    // Predicated region
    $region21: #{bidirectional_lstm.1} parent=5 // pred_check
      %p184 = pneg %p183
    $region22: #{bidirectional_lstm.1} parent=5 // pred_check_branch
      %186 = sbr.rel (%p184) target = $region24
    $region23: #{bidirectional_lstm.1} parent=5 // pred_region
      // Predicated region
      $region25: #{bidirectional_lstm.1} parent=23 // pred_check
        %p187 = pneg %p32
      $region26: #{bidirectional_lstm.1} parent=23 // pred_check_branch
        %189 = sbr.rel (%p187) target = $region28
      $region27: #{bidirectional_lstm.1} parent=23 // pred_region
        %s190 = smul.u32 4, %s12
        %p191 = scmp.lt.s32.totalorder %s190, 7
        %s192 = scalar_select %p191, %s190, 7
        %s193 = smul.addr %s192, 4
        %s194 = smul.addr %s193, 8
        %s195 = scalar_lea.vmem %s0, %s194
        %s196 = smul.u32 4, %s12
      $region28: #{bidirectional_lstm.1} parent=23 // pred_fallthru
        _
      // Predicated region
      $region29: #{bidirectional_lstm.1} parent=23 // pred_check
        %p197 = pneg %p60
      $region30: #{bidirectional_lstm.1} parent=23 // pred_check_branch
        %199 = sbr.rel (%p197) target = $region32
      $region31: #{bidirectional_lstm.1} parent=23 // pred_region
        %s200 = ssub.s32 1, %s12
        %s201 = smul.u32 4, %s200
        %p202 = scmp.lt.s32.totalorder %s201, 7
        %s203 = scalar_select %p202, %s201, 7
        %s204 = smul.addr %s203, 4
        %s205 = smul.addr %s204, 8
        %s206 = scalar_lea.vmem %s1, %s205
        %s207 = ssub.s32 1, %s12
        %s208 = smul.u32 4, %s207
      $region32: #{bidirectional_lstm.1} parent=23 // pred_fallthru
        _
    $region24: #{bidirectional_lstm.1} parent=5 // pred_fallthru
      _
    %p209 = scmp.le.s32.totalorder 1, %s12
    %p210 = scmp.lt.s32.totalorder %s12, 3
    %p211 = pnand %p209, %p210
    %p212 = pneg %p211
    // Predicated region
    $region33: #{bidirectional_lstm.1} parent=5 // pred_check
      _
    $region34: #{bidirectional_lstm.1} parent=5 // pred_check_branch
      %214 = sbr.rel (%p211) target = $region36
    $region35: #{bidirectional_lstm.1} parent=5 // pred_region
      %s215 = ssub.s32 %s12, 1
      %s216 = smul.u32 4, %s17
      %p217 = scmp.lt.s32.totalorder %s216, 7
      %s218 = scalar_select %p217, %s216, 7
      %s219 = smul.addr %s218, 4
      %s220 = smul.addr %s219, 8
      %s221 = scalar_lea.vmem %s0, %s220
      %p222 = pneg %p38
      %p223 = pneg %p35
      %s224 = ssub.s32 1, %s17
      %s225 = smul.u32 4, %s224
      %p226 = scmp.lt.s32.totalorder %s225, 7
      %s227 = scalar_select %p226, %s225, 7
      %s228 = smul.addr %s227, 4
      %s229 = smul.addr %s228, 8
      %s230 = scalar_lea.vmem %s1, %s229
      %p231 = pneg %p66
      %p232 = pneg %p63
      %p233 = pneg %p87
      %p234 = pneg %p84
      %p235 = pneg %p108
      %p236 = pneg %p105
      %p237 = pneg %p134
      %p238 = pneg %p131
      %s239 = smul.u32 4, %s17
      %p240 = scmp.lt.s32.totalorder %s239, 7
      %s241 = scalar_select %p240, %s239, 7
      %s242 = smul.addr %s241, 8
      %s243 = scalar_lea.vmem %s4, %s242
      %p244 = pneg %p162
      %p245 = pneg %p159
      %s246 = ssub.s32 1, %s17
      %s247 = smul.u32 4, %s246
      %p248 = scmp.lt.s32.totalorder %s247, 7
      %s249 = scalar_select %p248, %s247, 7
      %s250 = smul.addr %s249, 8
      %s251 = scalar_lea.vmem %s5, %s250
      %s252 = smul.u32 4, %s17
      %p253 = scmp.lt.s32.totalorder %s252, 7
      %s254 = scalar_select %p253, %s252, 7
      %s255 = smul.addr %s254, 4
      %s256 = smul.addr %s255, 8
      %s257 = scalar_lea.vmem %s0, %s256
      %s258 = smul.u32 4, %s17
      %s259 = ssub.s32 1, %s17
      %s260 = smul.u32 4, %s259
      %p261 = scmp.lt.s32.totalorder %s260, 7
      %s262 = scalar_select %p261, %s260, 7
      %s263 = smul.addr %s262, 4
      %s264 = smul.addr %s263, 8
      %s265 = scalar_lea.vmem %s1, %s264
      %s266 = ssub.s32 1, %s17
      %s267 = smul.u32 4, %s266
      %s268 = smul.u32 4, %s17
      %p269 = scmp.lt.s32.totalorder %s268, 7
      %s270 = scalar_select %p269, %s268, 7
      %s271 = smul.addr %s270, 8
      %s272 = scalar_lea.vmem %s4, %s271
      %s273 = smul.u32 4, %s17
      %s274 = ssub.s32 1, %s17
      %s275 = smul.u32 4, %s274
      %p276 = scmp.lt.s32.totalorder %s275, 7
      %s277 = scalar_select %p276, %s275, 7
      %s278 = smul.addr %s277, 8
      %s279 = scalar_lea.vmem %s5, %s278
      %s280 = ssub.s32 1, %s17
      %s281 = smul.u32 4, %s280
      %p282 = scmp.eq.s32.totalorder %s17, 0
      // Predicated region
      $region37: #{bidirectional_lstm.1} parent=35 // pred_check
        %p283 = pneg %p282
      $region38: #{bidirectional_lstm.1} parent=35 // pred_check_branch
        %285 = sbr.rel (%p283) target = $region40
      $region39: #{bidirectional_lstm.1} parent=35 // pred_region
        %286 = vst [vmem:[#allocation2] sm:$0xff] 0.0
        %287 = vst [vmem:[#allocation3] sm:$0xff] 0.0
        %288 = vst [vmem:[#allocation4] sm:$0xff] 0.0
        %289 = vst [vmem:[#allocation5] sm:$0xff] 0.0
      $region40: #{bidirectional_lstm.1} parent=35 // pred_fallthru
        _
      %v290 = vld [vmem:[%s2] sm:$0xff]
      %v291 = vld [vmem:[%s2 + $0x8] sm:$0xff]
      %v292 = vld [vmem:[%s2 + $0x10] sm:$0xff]
      %v293 = vld [vmem:[%s2 + $0x18] sm:$0xff]
      %v294 = vld [vmem:[%s2 + $0x20] sm:$0xff]
      %v295 = vld [vmem:[%s2 + $0x28] sm:$0xff]
      %v296 = vld [vmem:[%s2 + $0x30] sm:$0xff]
      %v297 = vld [vmem:[%s2 + $0x38] sm:$0xff]
      %v298 = vld [vmem:[%s2 + $0x40] sm:$0xff]
      %v299 = vld [vmem:[%s2 + $0x48] sm:$0xff]
      %v300 = vld [vmem:[%s2 + $0x50] sm:$0xff]
      %v301 = vld [vmem:[%s2 + $0x58] sm:$0xff]
      %v302 = vld [vmem:[%s2 + $0x60] sm:$0xff]
      %v303 = vld [vmem:[%s2 + $0x68] sm:$0xff]
      %v304 = vld [vmem:[%s2 + $0x70] sm:$0xff]
      %v305 = vld [vmem:[%s2 + $0x78] sm:$0xff]
      %v306 = vld [vmem:[%s2 + $0x80] sm:$0xff]
      %v307 = vld [vmem:[%s2 + $0x88] sm:$0xff]
      %v308 = vld [vmem:[%s2 + $0x90] sm:$0xff]
      %v309 = vld [vmem:[%s2 + $0x98] sm:$0xff]
      %v310 = vld [vmem:[%s2 + $0xa0] sm:$0xff]
      %v311 = vld [vmem:[%s2 + $0xa8] sm:$0xff]
      %v312 = vld [vmem:[%s2 + $0xb0] sm:$0xff]
      %v313 = vld [vmem:[%s2 + $0xb8] sm:$0xff]
      %v314 = vld [vmem:[%s2 + $0xc0] sm:$0xff]
      %v315 = vld [vmem:[%s2 + $0xc8] sm:$0xff]
      %v316 = vld [vmem:[%s2 + $0xd0] sm:$0xff]
      %v317 = vld [vmem:[%s2 + $0xd8] sm:$0xff]
      %v318 = vld [vmem:[%s2 + $0xe0] sm:$0xff]
      %v319 = vld [vmem:[%s2 + $0xe8] sm:$0xff]
      %v320 = vld [vmem:[%s2 + $0xf0] sm:$0xff]
      %v321 = vld [vmem:[%s2 + $0xf8] sm:$0xff]
      %v322 = vld [vmem:[%s2 + $0x100] sm:$0xff]
      %v323 = vld [vmem:[%s2 + $0x108] sm:$0xff]
      %v324 = vld [vmem:[%s2 + $0x110] sm:$0xff]
      %v325 = vld [vmem:[%s2 + $0x118] sm:$0xff]
      %v326 = vld [vmem:[%s2 + $0x120] sm:$0xff]
      %v327 = vld [vmem:[%s2 + $0x128] sm:$0xff]
      %v328 = vld [vmem:[%s2 + $0x130] sm:$0xff]
      %v329 = vld [vmem:[%s2 + $0x138] sm:$0xff]
      %v330 = vld [vmem:[%s2 + $0x140] sm:$0xff]
      %v331 = vld [vmem:[%s2 + $0x148] sm:$0xff]
      %v332 = vld [vmem:[%s2 + $0x150] sm:$0xff]
      %v333 = vld [vmem:[%s2 + $0x158] sm:$0xff]
      %v334 = vld [vmem:[%s2 + $0x160] sm:$0xff]
      %v335 = vld [vmem:[%s2 + $0x168] sm:$0xff]
      %v336 = vld [vmem:[%s2 + $0x170] sm:$0xff]
      %v337 = vld [vmem:[%s2 + $0x178] sm:$0xff]
      %v338 = vld [vmem:[%s2 + $0x180] sm:$0xff]
      %v339 = vld [vmem:[%s2 + $0x188] sm:$0xff]
      %v340 = vld [vmem:[%s2 + $0x190] sm:$0xff]
      %v341 = vld [vmem:[%s2 + $0x198] sm:$0xff]
      %v342 = vld [vmem:[%s2 + $0x1a0] sm:$0xff]
      %v343 = vld [vmem:[%s2 + $0x1a8] sm:$0xff]
      %v344 = vld [vmem:[%s2 + $0x1b0] sm:$0xff]
      %v345 = vld [vmem:[%s2 + $0x1b8] sm:$0xff]
      %v346 = vld [vmem:[%s2 + $0x1c0] sm:$0xff]
      %v347 = vld [vmem:[%s2 + $0x1c8] sm:$0xff]
      %v348 = vld [vmem:[%s2 + $0x1d0] sm:$0xff]
      %v349 = vld [vmem:[%s2 + $0x1d8] sm:$0xff]
      %v350 = vld [vmem:[%s2 + $0x1e0] sm:$0xff]
      %v351 = vld [vmem:[%s2 + $0x1e8] sm:$0xff]
      %v352 = vld [vmem:[%s2 + $0x1f0] sm:$0xff]
      %v353 = vld [vmem:[%s2 + $0x1f8] sm:$0xff]
      %v354 = vld [vmem:[%s3] sm:$0xff]
      %v355 = vld [vmem:[%s3 + $0x8] sm:$0xff]
      %v356 = vld [vmem:[%s3 + $0x10] sm:$0xff]
      %v357 = vld [vmem:[%s3 + $0x18] sm:$0xff]
      %v358 = vld [vmem:[%s3 + $0x20] sm:$0xff]
      %v359 = vld [vmem:[%s3 + $0x28] sm:$0xff]
      %v360 = vld [vmem:[%s3 + $0x30] sm:$0xff]
      %v361 = vld [vmem:[%s3 + $0x38] sm:$0xff]
      %v362 = vld [vmem:[%s3 + $0x40] sm:$0xff]
      %v363 = vld [vmem:[%s3 + $0x48] sm:$0xff]
      %v364 = vld [vmem:[%s3 + $0x50] sm:$0xff]
      %v365 = vld [vmem:[%s3 + $0x58] sm:$0xff]
      %v366 = vld [vmem:[%s3 + $0x60] sm:$0xff]
      %v367 = vld [vmem:[%s3 + $0x68] sm:$0xff]
      %v368 = vld [vmem:[%s3 + $0x70] sm:$0xff]
      %v369 = vld [vmem:[%s3 + $0x78] sm:$0xff]
      %v370 = vld [vmem:[%s3 + $0x80] sm:$0xff]
      %v371 = vld [vmem:[%s3 + $0x88] sm:$0xff]
      %v372 = vld [vmem:[%s3 + $0x90] sm:$0xff]
      %v373 = vld [vmem:[%s3 + $0x98] sm:$0xff]
      %v374 = vld [vmem:[%s3 + $0xa0] sm:$0xff]
      %v375 = vld [vmem:[%s3 + $0xa8] sm:$0xff]
      %v376 = vld [vmem:[%s3 + $0xb0] sm:$0xff]
      %v377 = vld [vmem:[%s3 + $0xb8] sm:$0xff]
      %v378 = vld [vmem:[%s3 + $0xc0] sm:$0xff]
      %v379 = vld [vmem:[%s3 + $0xc8] sm:$0xff]
      %v380 = vld [vmem:[%s3 + $0xd0] sm:$0xff]
      %v381 = vld [vmem:[%s3 + $0xd8] sm:$0xff]
      %v382 = vld [vmem:[%s3 + $0xe0] sm:$0xff]
      %v383 = vld [vmem:[%s3 + $0xe8] sm:$0xff]
      %v384 = vld [vmem:[%s3 + $0xf0] sm:$0xff]
      %v385 = vld [vmem:[%s3 + $0xf8] sm:$0xff]
      %v386 = vld [vmem:[%s3 + $0x100] sm:$0xff]
      %v387 = vld [vmem:[%s3 + $0x108] sm:$0xff]
      %v388 = vld [vmem:[%s3 + $0x110] sm:$0xff]
      %v389 = vld [vmem:[%s3 + $0x118] sm:$0xff]
      %v390 = vld [vmem:[%s3 + $0x120] sm:$0xff]
      %v391 = vld [vmem:[%s3 + $0x128] sm:$0xff]
      %v392 = vld [vmem:[%s3 + $0x130] sm:$0xff]
      %v393 = vld [vmem:[%s3 + $0x138] sm:$0xff]
      %v394 = vld [vmem:[%s3 + $0x140] sm:$0xff]
      %v395 = vld [vmem:[%s3 + $0x148] sm:$0xff]
      %v396 = vld [vmem:[%s3 + $0x150] sm:$0xff]
      %v397 = vld [vmem:[%s3 + $0x158] sm:$0xff]
      %v398 = vld [vmem:[%s3 + $0x160] sm:$0xff]
      %v399 = vld [vmem:[%s3 + $0x168] sm:$0xff]
      %v400 = vld [vmem:[%s3 + $0x170] sm:$0xff]
      %v401 = vld [vmem:[%s3 + $0x178] sm:$0xff]
      %v402 = vld [vmem:[%s3 + $0x180] sm:$0xff]
      %v403 = vld [vmem:[%s3 + $0x188] sm:$0xff]
      %v404 = vld [vmem:[%s3 + $0x190] sm:$0xff]
      %v405 = vld [vmem:[%s3 + $0x198] sm:$0xff]
      %v406 = vld [vmem:[%s3 + $0x1a0] sm:$0xff]
      %v407 = vld [vmem:[%s3 + $0x1a8] sm:$0xff]
      %v408 = vld [vmem:[%s3 + $0x1b0] sm:$0xff]
      %v409 = vld [vmem:[%s3 + $0x1b8] sm:$0xff]
      %v410 = vld [vmem:[%s3 + $0x1c0] sm:$0xff]
      %v411 = vld [vmem:[%s3 + $0x1c8] sm:$0xff]
      %v412 = vld [vmem:[%s3 + $0x1d0] sm:$0xff]
      %v413 = vld [vmem:[%s3 + $0x1d8] sm:$0xff]
      %v414 = vld [vmem:[%s3 + $0x1e0] sm:$0xff]
      %v415 = vld [vmem:[%s3 + $0x1e8] sm:$0xff]
      %v416 = vld [vmem:[%s3 + $0x1f0] sm:$0xff]
      %v417 = vld [vmem:[%s3 + $0x1f8] sm:$0xff]
      %s418 = smul.u32 0, 4
      %s419 = smul.addr %s418, 8
      %s420 = scalar_lea.vmem %s257, %s419
      %v421 = vld [vmem:[%s420] sm:$0xff]
      %v422 = vld [vmem:[%s420 + $0x8] sm:$0xff]
      %v423 = vld [vmem:[%s420 + $0x10] sm:$0xff]
      %v424 = vld [vmem:[%s420 + $0x18] sm:$0xff]
      %v425 = vld [vmem:[#allocation2] sm:$0xff]
      %426 = vmatprep.subr.mxu0 %v291
      %427 = vmatpush1.msra.mxu0 %v290
      %428 = vmatprep.subr.mxu0 %v295
      %429 = vmatpush1.msra.mxu0 %v294
      %430 = vmatprep.subr.mxu0 %v299
      %431 = vmatpush1.msra.mxu0 %v298
      %432 = vmatprep.subr.mxu0 %v303
      %433 = vmatpush1.msra.mxu0 %v302
      %434 = vmatprep.subr.mxu0 %v307
      %435 = vmatpush1.msra.mxu0 %v306
      %436 = vmatprep.subr.mxu0 %v311
      %437 = vmatpush1.msra.mxu0 %v310
      %438 = vmatprep.subr.mxu0 %v315
      %439 = vmatpush1.msra.mxu0 %v314
      %440 = vmatprep.subr.mxu0 %v319
      %441 = vmatpush1.msra.mxu0 %v318
      %442 = vmatprep.subr.mxu0 %v323
      %443 = vmatpush1.msra.mxu0 %v322
      %444 = vmatprep.subr.mxu0 %v327
      %445 = vmatpush1.msra.mxu0 %v326
      %446 = vmatprep.subr.mxu0 %v331
      %447 = vmatpush1.msra.mxu0 %v330
      %448 = vmatprep.subr.mxu0 %v335
      %449 = vmatpush1.msra.mxu0 %v334
      %450 = vmatprep.subr.mxu0 %v339
      %451 = vmatpush1.msra.mxu0 %v338
      %452 = vmatprep.subr.mxu0 %v343
      %453 = vmatpush1.msra.mxu0 %v342
      %454 = vmatprep.subr.mxu0 %v347
      %455 = vmatpush1.msra.mxu0 %v346
      %456 = vmatprep.subr.mxu0 %v351
      %457 = vmatpush1.msra.mxu0 %v350
      %458 = vmatprep.subr.mxu0 0.0
      %459 = vmatpush1.msra.mxu0 0.0
      %460 = vmatprep.subr.mxu0 0.0
      %461 = vmatpush1.msra.mxu0 0.0
      %462 = vmatprep.subr.mxu0 0.0
      %463 = vmatpush1.msra.mxu0 0.0
      %464 = vmatprep.subr.mxu0 0.0
      %465 = vmatpush1.msra.mxu0 0.0
      %466 = vmatprep.subr.mxu0 0.0
      %467 = vmatpush1.msra.mxu0 0.0
      %468 = vmatprep.subr.mxu0 0.0
      %469 = vmatpush1.msra.mxu0 0.0
      %470 = vmatprep.subr.mxu0 0.0
      %471 = vmatpush1.msra.mxu0 0.0
      %472 = vmatprep.subr.mxu0 0.0
      %473 = vmatpush1.msra.mxu0 0.0
      %474 = vmatprep.subr.mxu0 0.0
      %475 = vmatpush1.msra.mxu0 0.0
      %476 = vmatprep.subr.mxu0 0.0
      %477 = vmatpush1.msra.mxu0 0.0
      %478 = vmatprep.subr.mxu0 0.0
      %479 = vmatpush1.msra.mxu0 0.0
      %480 = vmatprep.subr.mxu0 0.0
      %481 = vmatpush1.msra.mxu0 0.0
      %482 = vmatprep.subr.mxu0 0.0
      %483 = vmatpush1.msra.mxu0 0.0
      %484 = vmatprep.subr.mxu0 0.0
      %485 = vmatpush1.msra.mxu0 0.0
      %486 = vmatprep.subr.mxu0 0.0
      %487 = vmatpush1.msra.mxu0 0.0
      %488 = vmatprep.subr.mxu0 0.0
      %489 = vmatpush1.msra.mxu0 0.0
      %490 = vmatprep.mubr.f32.mxu0 0.0
      %491 = vmatmul.mubr.f32.gmra.mrb[0].mxu0 %v425
      %v492 = vpop.f32.mrb[0].mxu0
      %v493 = vadd.f32 0.0, %v492
      %v494 = vpop.f32.mrb[0].mxu0
      %v495 = vadd.f32 0.0, %v494
      %496 = vdwg.mxu0
      %497 = vmatprep.subr.mxu0 %v293
      %498 = vmatpush1.msra.mxu0 %v292
      %499 = vmatprep.subr.mxu0 %v297
      %500 = vmatpush1.msra.mxu0 %v296
      %501 = vmatprep.subr.mxu0 %v301
      %502 = vmatpush1.msra.mxu0 %v300
      %503 = vmatprep.subr.mxu0 %v305
      %504 = vmatpush1.msra.mxu0 %v304
      %505 = vmatprep.subr.mxu0 %v309
      %506 = vmatpush1.msra.mxu0 %v308
      %507 = vmatprep.subr.mxu0 %v313
      %508 = vmatpush1.msra.mxu0 %v312
      %509 = vmatprep.subr.mxu0 %v317
      %510 = vmatpush1.msra.mxu0 %v316
      %511 = vmatprep.subr.mxu0 %v321
      %512 = vmatpush1.msra.mxu0 %v320
      %513 = vmatprep.subr.mxu0 %v325
      %514 = vmatpush1.msra.mxu0 %v324
      %515 = vmatprep.subr.mxu0 %v329
      %516 = vmatpush1.msra.mxu0 %v328
      %517 = vmatprep.subr.mxu0 %v333
      %518 = vmatpush1.msra.mxu0 %v332
      %519 = vmatprep.subr.mxu0 %v337
      %520 = vmatpush1.msra.mxu0 %v336
      %521 = vmatprep.subr.mxu0 %v341
      %522 = vmatpush1.msra.mxu0 %v340
      %523 = vmatprep.subr.mxu0 %v345
      %524 = vmatpush1.msra.mxu0 %v344
      %525 = vmatprep.subr.mxu0 %v349
      %526 = vmatpush1.msra.mxu0 %v348
      %527 = vmatprep.subr.mxu0 %v353
      %528 = vmatpush1.msra.mxu0 %v352
      %529 = vmatprep.subr.mxu0 0.0
      %530 = vmatpush1.msra.mxu0 0.0
      %531 = vmatprep.subr.mxu0 0.0
      %532 = vmatpush1.msra.mxu0 0.0
      %533 = vmatprep.subr.mxu0 0.0
      %534 = vmatpush1.msra.mxu0 0.0
      %535 = vmatprep.subr.mxu0 0.0
      %536 = vmatpush1.msra.mxu0 0.0
      %537 = vmatprep.subr.mxu0 0.0
      %538 = vmatpush1.msra.mxu0 0.0
      %539 = vmatprep.subr.mxu0 0.0
      %540 = vmatpush1.msra.mxu0 0.0
      %541 = vmatprep.subr.mxu0 0.0
      %542 = vmatpush1.msra.mxu0 0.0
      %543 = vmatprep.subr.mxu0 0.0
      %544 = vmatpush1.msra.mxu0 0.0
      %545 = vmatprep.subr.mxu0 0.0
      %546 = vmatpush1.msra.mxu0 0.0
      %547 = vmatprep.subr.mxu0 0.0
      %548 = vmatpush1.msra.mxu0 0.0
      %549 = vmatprep.subr.mxu0 0.0
      %550 = vmatpush1.msra.mxu0 0.0
      %551 = vmatprep.subr.mxu0 0.0
      %552 = vmatpush1.msra.mxu0 0.0
      %553 = vmatprep.subr.mxu0 0.0
      %554 = vmatpush1.msra.mxu0 0.0
      %555 = vmatprep.subr.mxu0 0.0
      %556 = vmatpush1.msra.mxu0 0.0
      %557 = vmatprep.subr.mxu0 0.0
      %558 = vmatpush1.msra.mxu0 0.0
      %559 = vmatprep.subr.mxu0 0.0
      %560 = vmatpush1.msra.mxu0 0.0
      %561 = vmatprep.mubr.f32.mxu0 0.0
      %562 = vmatmul.mubr.f32.gmra.mrb[0].mxu0 %v425
      %v563 = vpop.f32.mrb[0].mxu0
      %v564 = vadd.f32 0.0, %v563
      %v565 = vpop.f32.mrb[0].mxu0
      %v566 = vadd.f32 0.0, %v565
      %567 = vdwg.mxu0
      %v568 = vadd.f32 %v421, %v493
      %v569 = vadd.f32 %v422, %v495
      %v570 = vadd.f32 %v423, %v564
      %v571 = vadd.f32 %v424, %v566
      %s572 = smul.u32 3, 4
      %s573 = smul.addr %s572, 8
      %s574 = scalar_lea.vmem %s265, %s573
      %v575 = vld [vmem:[%s574] sm:$0xff]
      %v576 = vld [vmem:[%s574 + $0x8] sm:$0xff]
      %v577 = vld [vmem:[%s574 + $0x10] sm:$0xff]
      %v578 = vld [vmem:[%s574 + $0x18] sm:$0xff]
      %v579 = vld [vmem:[#allocation4] sm:$0xff]
      %580 = vmatprep.subr.mxu0 %v355
      %581 = vmatpush1.msra.mxu0 %v354
      %582 = vmatprep.subr.mxu0 %v359
      %583 = vmatpush1.msra.mxu0 %v358
      %584 = vmatprep.subr.mxu0 %v363
      %585 = vmatpush1.msra.mxu0 %v362
      %586 = vmatprep.subr.mxu0 %v367
      %587 = vmatpush1.msra.mxu0 %v366
      %588 = vmatprep.subr.mxu0 %v371
      %589 = vmatpush1.msra.mxu0 %v370
      %590 = vmatprep.subr.mxu0 %v375
      %591 = vmatpush1.msra.mxu0 %v374
      %592 = vmatprep.subr.mxu0 %v379
      %593 = vmatpush1.msra.mxu0 %v378
      %594 = vmatprep.subr.mxu0 %v383
      %595 = vmatpush1.msra.mxu0 %v382
      %596 = vmatprep.subr.mxu0 %v387
      %597 = vmatpush1.msra.mxu0 %v386
      %598 = vmatprep.subr.mxu0 %v391
      %599 = vmatpush1.msra.mxu0 %v390
      %600 = vmatprep.subr.mxu0 %v395
      %601 = vmatpush1.msra.mxu0 %v394
      %602 = vmatprep.subr.mxu0 %v399
      %603 = vmatpush1.msra.mxu0 %v398
      %604 = vmatprep.subr.mxu0 %v403
      %605 = vmatpush1.msra.mxu0 %v402
      %606 = vmatprep.subr.mxu0 %v407
      %607 = vmatpush1.msra.mxu0 %v406
      %608 = vmatprep.subr.mxu0 %v411
      %609 = vmatpush1.msra.mxu0 %v410
      %610 = vmatprep.subr.mxu0 %v415
      %611 = vmatpush1.msra.mxu0 %v414
      %612 = vmatprep.subr.mxu0 0.0
      %613 = vmatpush1.msra.mxu0 0.0
      %614 = vmatprep.subr.mxu0 0.0
      %615 = vmatpush1.msra.mxu0 0.0
      %616 = vmatprep.subr.mxu0 0.0
      %617 = vmatpush1.msra.mxu0 0.0
      %618 = vmatprep.subr.mxu0 0.0
      %619 = vmatpush1.msra.mxu0 0.0
      %620 = vmatprep.subr.mxu0 0.0
      %621 = vmatpush1.msra.mxu0 0.0
      %622 = vmatprep.subr.mxu0 0.0
      %623 = vmatpush1.msra.mxu0 0.0
      %624 = vmatprep.subr.mxu0 0.0
      %625 = vmatpush1.msra.mxu0 0.0
      %626 = vmatprep.subr.mxu0 0.0
      %627 = vmatpush1.msra.mxu0 0.0
      %628 = vmatprep.subr.mxu0 0.0
      %629 = vmatpush1.msra.mxu0 0.0
      %630 = vmatprep.subr.mxu0 0.0
      %631 = vmatpush1.msra.mxu0 0.0
      %632 = vmatprep.subr.mxu0 0.0
      %633 = vmatpush1.msra.mxu0 0.0
      %634 = vmatprep.subr.mxu0 0.0
      %635 = vmatpush1.msra.mxu0 0.0
      %636 = vmatprep.subr.mxu0 0.0
      %637 = vmatpush1.msra.mxu0 0.0
      %638 = vmatprep.subr.mxu0 0.0
      %639 = vmatpush1.msra.mxu0 0.0
      %640 = vmatprep.subr.mxu0 0.0
      %641 = vmatpush1.msra.mxu0 0.0
      %642 = vmatprep.subr.mxu0 0.0
      %643 = vmatpush1.msra.mxu0 0.0
      %644 = vmatprep.mubr.f32.mxu0 0.0
      %645 = vmatmul.mubr.f32.gmra.mrb[0].mxu0 %v579
      %v646 = vpop.f32.mrb[0].mxu0
      %v647 = vadd.f32 0.0, %v646
      %v648 = vpop.f32.mrb[0].mxu0
      %v649 = vadd.f32 0.0, %v648
      %650 = vdwg.mxu0
      %651 = vmatprep.subr.mxu0 %v357
      %652 = vmatpush1.msra.mxu0 %v356
      %653 = vmatprep.subr.mxu0 %v361
      %654 = vmatpush1.msra.mxu0 %v360
      %655 = vmatprep.subr.mxu0 %v365
      %656 = vmatpush1.msra.mxu0 %v364
      %657 = vmatprep.subr.mxu0 %v369
      %658 = vmatpush1.msra.mxu0 %v368
      %659 = vmatprep.subr.mxu0 %v373
      %660 = vmatpush1.msra.mxu0 %v372
      %661 = vmatprep.subr.mxu0 %v377
      %662 = vmatpush1.msra.mxu0 %v376
      %663 = vmatprep.subr.mxu0 %v381
      %664 = vmatpush1.msra.mxu0 %v380
      %665 = vmatprep.subr.mxu0 %v385
      %666 = vmatpush1.msra.mxu0 %v384
      %667 = vmatprep.subr.mxu0 %v389
      %668 = vmatpush1.msra.mxu0 %v388
      %669 = vmatprep.subr.mxu0 %v393
      %670 = vmatpush1.msra.mxu0 %v392
      %671 = vmatprep.subr.mxu0 %v397
      %672 = vmatpush1.msra.mxu0 %v396
      %673 = vmatprep.subr.mxu0 %v401
      %674 = vmatpush1.msra.mxu0 %v400
      %675 = vmatprep.subr.mxu0 %v405
      %676 = vmatpush1.msra.mxu0 %v404
      %677 = vmatprep.subr.mxu0 %v409
      %678 = vmatpush1.msra.mxu0 %v408
      %679 = vmatprep.subr.mxu0 %v413
      %680 = vmatpush1.msra.mxu0 %v412
      %681 = vmatprep.subr.mxu0 %v417
      %682 = vmatpush1.msra.mxu0 %v416
      %683 = vmatprep.subr.mxu0 0.0
      %684 = vmatpush1.msra.mxu0 0.0
      %685 = vmatprep.subr.mxu0 0.0
      %686 = vmatpush1.msra.mxu0 0.0
      %687 = vmatprep.subr.mxu0 0.0
      %688 = vmatpush1.msra.mxu0 0.0
      %689 = vmatprep.subr.mxu0 0.0
      %690 = vmatpush1.msra.mxu0 0.0
      %691 = vmatprep.subr.mxu0 0.0
      %692 = vmatpush1.msra.mxu0 0.0
      %693 = vmatprep.subr.mxu0 0.0
      %694 = vmatpush1.msra.mxu0 0.0
      %695 = vmatprep.subr.mxu0 0.0
      %696 = vmatpush1.msra.mxu0 0.0
      %697 = vmatprep.subr.mxu0 0.0
      %698 = vmatpush1.msra.mxu0 0.0
      %699 = vmatprep.subr.mxu0 0.0
      %700 = vmatpush1.msra.mxu0 0.0
      %701 = vmatprep.subr.mxu0 0.0
      %702 = vmatpush1.msra.mxu0 0.0
      %703 = vmatprep.subr.mxu0 0.0
      %704 = vmatpush1.msra.mxu0 0.0
      %705 = vmatprep.subr.mxu0 0.0
      %706 = vmatpush1.msra.mxu0 0.0
      %707 = vmatprep.subr.mxu0 0.0
      %708 = vmatpush1.msra.mxu0 0.0
      %709 = vmatprep.subr.mxu0 0.0
      %710 = vmatpush1.msra.mxu0 0.0
      %711 = vmatprep.subr.mxu0 0.0
      %712 = vmatpush1.msra.mxu0 0.0
      %713 = vmatprep.subr.mxu0 0.0
      %714 = vmatpush1.msra.mxu0 0.0
      %715 = vmatprep.mubr.f32.mxu0 0.0
      %716 = vmatmul.mubr.f32.gmra.mrb[0].mxu0 %v579
      %v717 = vpop.f32.mrb[0].mxu0
      %v718 = vadd.f32 0.0, %v717
      %v719 = vpop.f32.mrb[0].mxu0
      %v720 = vadd.f32 0.0, %v719
      %721 = vdwg.mxu0
      %v722 = vadd.f32 %v575, %v647
      %v723 = vadd.f32 %v576, %v649
      %v724 = vadd.f32 %v577, %v718
      %v725 = vadd.f32 %v578, %v720
      %v726 = vld [vmem:[#allocation3] sm:$0xff]
      %v727 = vmul.f32 %v568, 0.5
      %v728 = vtanh.pop %v727
      %v729 = vmul.f32 %v728, 0.5
      %v730 = vadd.f32 %v729, 0.5
      %v731 = vmul.f32 %v569, 0.5
      %v732 = vtanh.pop %v731
      %v733 = vmul.f32 %v732, 0.5
      %v734 = vadd.f32 %v733, 0.5
      %v735 = vtanh.pop %v570
      %v736 = vmul.f32 %v571, 0.5
      %v737 = vtanh.pop %v736
      %v738 = vmul.f32 %v737, 0.5
      %v739 = vadd.f32 %v738, 0.5
      %v740 = vmul.f32 %v734, %v726
      %v741 = vmul.f32 %v730, %v735
      %v742 = vadd.f32 %v740, %v741
      %v743 = vtanh.pop %v742
      %v744 = vmul.f32 %v739, %v743
      %v745 = vld [vmem:[#allocation5] sm:$0xff]
      %v746 = vmul.f32 %v722, 0.5
      %v747 = vtanh.pop %v746
      %v748 = vmul.f32 %v747, 0.5
      %v749 = vadd.f32 %v748, 0.5
      %v750 = vmul.f32 %v723, 0.5
      %v751 = vtanh.pop %v750
      %v752 = vmul.f32 %v751, 0.5
      %v753 = vadd.f32 %v752, 0.5
      %v754 = vtanh.pop %v724
      %v755 = vmul.f32 %v725, 0.5
      %v756 = vtanh.pop %v755
      %v757 = vmul.f32 %v756, 0.5
      %v758 = vadd.f32 %v757, 0.5
      %v759 = vmul.f32 %v753, %v745
      %v760 = vmul.f32 %v749, %v754
      %v761 = vadd.f32 %v759, %v760
      %v762 = vtanh.pop %v761
      %v763 = vmul.f32 %v758, %v762
      %764 = vst [vmem:[#allocation2] sm:$0xff] %v744
      %765 = vst [vmem:[#allocation3] sm:$0xff] %v742
      %766 = vst [vmem:[#allocation4] sm:$0xff] %v763
      %767 = vst [vmem:[#allocation5] sm:$0xff] %v761
      %768 = vst [vmem:[%s272] sm:$0xff] %v744
      %s769 = scalar_lea.vmem %s279, 24
      %770 = vst [vmem:[%s769] sm:$0xff] %v763
      %s771 = smul.u32 1, 4
      %s772 = smul.addr %s771, 8
      %s773 = scalar_lea.vmem %s257, %s772
      %v774 = vld [vmem:[%s773] sm:$0xff]
      %v775 = vld [vmem:[%s773 + $0x8] sm:$0xff]
      %v776 = vld [vmem:[%s773 + $0x10] sm:$0xff]
      %v777 = vld [vmem:[%s773 + $0x18] sm:$0xff]
      %v778 = vld [vmem:[#allocation2] sm:$0xff]
      %779 = vmatprep.subr.mxu0 %v291
      %780 = vmatpush1.msra.mxu0 %v290
      %781 = vmatprep.subr.mxu0 %v295
      %782 = vmatpush1.msra.mxu0 %v294
      %783 = vmatprep.subr.mxu0 %v299
      %784 = vmatpush1.msra.mxu0 %v298
      %785 = vmatprep.subr.mxu0 %v303
      %786 = vmatpush1.msra.mxu0 %v302
      %787 = vmatprep.subr.mxu0 %v307
      %788 = vmatpush1.msra.mxu0 %v306
      %789 = vmatprep.subr.mxu0 %v311
      %790 = vmatpush1.msra.mxu0 %v310
      %791 = vmatprep.subr.mxu0 %v315
      %792 = vmatpush1.msra.mxu0 %v314
      %793 = vmatprep.subr.mxu0 %v319
      %794 = vmatpush1.msra.mxu0 %v318
      %795 = vmatprep.subr.mxu0 %v323
      %796 = vmatpush1.msra.mxu0 %v322
      %797 = vmatprep.subr.mxu0 %v327
      %798 = vmatpush1.msra.mxu0 %v326
      %799 = vmatprep.subr.mxu0 %v331
      %800 = vmatpush1.msra.mxu0 %v330
      %801 = vmatprep.subr.mxu0 %v335
      %802 = vmatpush1.msra.mxu0 %v334
      %803 = vmatprep.subr.mxu0 %v339
      %804 = vmatpush1.msra.mxu0 %v338
      %805 = vmatprep.subr.mxu0 %v343
      %806 = vmatpush1.msra.mxu0 %v342
      %807 = vmatprep.subr.mxu0 %v347
      %808 = vmatpush1.msra.mxu0 %v346
      %809 = vmatprep.subr.mxu0 %v351
      %810 = vmatpush1.msra.mxu0 %v350
      %811 = vmatprep.subr.mxu0 0.0
      %812 = vmatpush1.msra.mxu0 0.0
      %813 = vmatprep.subr.mxu0 0.0
      %814 = vmatpush1.msra.mxu0 0.0
      %815 = vmatprep.subr.mxu0 0.0
      %816 = vmatpush1.msra.mxu0 0.0
      %817 = vmatprep.subr.mxu0 0.0
      %818 = vmatpush1.msra.mxu0 0.0
      %819 = vmatprep.subr.mxu0 0.0
      %820 = vmatpush1.msra.mxu0 0.0
      %821 = vmatprep.subr.mxu0 0.0
      %822 = vmatpush1.msra.mxu0 0.0
      %823 = vmatprep.subr.mxu0 0.0
      %824 = vmatpush1.msra.mxu0 0.0
      %825 = vmatprep.subr.mxu0 0.0
      %826 = vmatpush1.msra.mxu0 0.0
      %827 = vmatprep.subr.mxu0 0.0
      %828 = vmatpush1.msra.mxu0 0.0
      %829 = vmatprep.subr.mxu0 0.0
      %830 = vmatpush1.msra.mxu0 0.0
      %831 = vmatprep.subr.mxu0 0.0
      %832 = vmatpush1.msra.mxu0 0.0
      %833 = vmatprep.subr.mxu0 0.0
      %834 = vmatpush1.msra.mxu0 0.0
      %835 = vmatprep.subr.mxu0 0.0
      %836 = vmatpush1.msra.mxu0 0.0
      %837 = vmatprep.subr.mxu0 0.0
      %838 = vmatpush1.msra.mxu0 0.0
      %839 = vmatprep.subr.mxu0 0.0
      %840 = vmatpush1.msra.mxu0 0.0
      %841 = vmatprep.subr.mxu0 0.0
      %842 = vmatpush1.msra.mxu0 0.0
      %843 = vmatprep.mubr.f32.mxu0 0.0
      %844 = vmatmul.mubr.f32.gmra.mrb[0].mxu0 %v778
      %v845 = vpop.f32.mrb[0].mxu0
      %v846 = vadd.f32 0.0, %v845
      %v847 = vpop.f32.mrb[0].mxu0
      %v848 = vadd.f32 0.0, %v847
      %849 = vdwg.mxu0
      %850 = vmatprep.subr.mxu0 %v293
      %851 = vmatpush1.msra.mxu0 %v292
      %852 = vmatprep.subr.mxu0 %v297
      %853 = vmatpush1.msra.mxu0 %v296
      %854 = vmatprep.subr.mxu0 %v301
      %855 = vmatpush1.msra.mxu0 %v300
      %856 = vmatprep.subr.mxu0 %v305
      %857 = vmatpush1.msra.mxu0 %v304
      %858 = vmatprep.subr.mxu0 %v309
      %859 = vmatpush1.msra.mxu0 %v308
      %860 = vmatprep.subr.mxu0 %v313
      %861 = vmatpush1.msra.mxu0 %v312
      %862 = vmatprep.subr.mxu0 %v317
      %863 = vmatpush1.msra.mxu0 %v316
      %864 = vmatprep.subr.mxu0 %v321
      %865 = vmatpush1.msra.mxu0 %v320
      %866 = vmatprep.subr.mxu0 %v325
      %867 = vmatpush1.msra.mxu0 %v324
      %868 = vmatprep.subr.mxu0 %v329
      %869 = vmatpush1.msra.mxu0 %v328
      %870 = vmatprep.subr.mxu0 %v333
      %871 = vmatpush1.msra.mxu0 %v332
      %872 = vmatprep.subr.mxu0 %v337
      %873 = vmatpush1.msra.mxu0 %v336
      %874 = vmatprep.subr.mxu0 %v341
      %875 = vmatpush1.msra.mxu0 %v340
      %876 = vmatprep.subr.mxu0 %v345
      %877 = vmatpush1.msra.mxu0 %v344
      %878 = vmatprep.subr.mxu0 %v349
      %879 = vmatpush1.msra.mxu0 %v348
      %880 = vmatprep.subr.mxu0 %v353
      %881 = vmatpush1.msra.mxu0 %v352
      %882 = vmatprep.subr.mxu0 0.0
      %883 = vmatpush1.msra.mxu0 0.0
      %884 = vmatprep.subr.mxu0 0.0
      %885 = vmatpush1.msra.mxu0 0.0
      %886 = vmatprep.subr.mxu0 0.0
      %887 = vmatpush1.msra.mxu0 0.0
      %888 = vmatprep.subr.mxu0 0.0
      %889 = vmatpush1.msra.mxu0 0.0
      %890 = vmatprep.subr.mxu0 0.0
      %891 = vmatpush1.msra.mxu0 0.0
      %892 = vmatprep.subr.mxu0 0.0
      %893 = vmatpush1.msra.mxu0 0.0
      %894 = vmatprep.subr.mxu0 0.0
      %895 = vmatpush1.msra.mxu0 0.0
      %896 = vmatprep.subr.mxu0 0.0
      %897 = vmatpush1.msra.mxu0 0.0
      %898 = vmatprep.subr.mxu0 0.0
      %899 = vmatpush1.msra.mxu0 0.0
      %900 = vmatprep.subr.mxu0 0.0
      %901 = vmatpush1.msra.mxu0 0.0
      %902 = vmatprep.subr.mxu0 0.0
      %903 = vmatpush1.msra.mxu0 0.0
      %904 = vmatprep.subr.mxu0 0.0
      %905 = vmatpush1.msra.mxu0 0.0
      %906 = vmatprep.subr.mxu0 0.0
      %907 = vmatpush1.msra.mxu0 0.0
      %908 = vmatprep.subr.mxu0 0.0
      %909 = vmatpush1.msra.mxu0 0.0
      %910 = vmatprep.subr.mxu0 0.0
      %911 = vmatpush1.msra.mxu0 0.0
      %912 = vmatprep.subr.mxu0 0.0
      %913 = vmatpush1.msra.mxu0 0.0
      %914 = vmatprep.mubr.f32.mxu0 0.0
      %915 = vmatmul.mubr.f32.gmra.mrb[0].mxu0 %v778
      %v916 = vpop.f32.mrb[0].mxu0
      %v917 = vadd.f32 0.0, %v916
      %v918 = vpop.f32.mrb[0].mxu0
      %v919 = vadd.f32 0.0, %v918
      %920 = vdwg.mxu0
      %v921 = vadd.f32 %v774, %v846
      %v922 = vadd.f32 %v775, %v848
      %v923 = vadd.f32 %v776, %v917
      %v924 = vadd.f32 %v777, %v919
      %s925 = smul.u32 2, 4
      %s926 = smul.addr %s925, 8
      %s927 = scalar_lea.vmem %s265, %s926
      %v928 = vld [vmem:[%s927] sm:$0xff]
      %v929 = vld [vmem:[%s927 + $0x8] sm:$0xff]
      %v930 = vld [vmem:[%s927 + $0x10] sm:$0xff]
      %v931 = vld [vmem:[%s927 + $0x18] sm:$0xff]
      %v932 = vld [vmem:[#allocation4] sm:$0xff]
      %933 = vmatprep.subr.mxu0 %v355
      %934 = vmatpush1.msra.mxu0 %v354
      %935 = vmatprep.subr.mxu0 %v359
      %936 = vmatpush1.msra.mxu0 %v358
      %937 = vmatprep.subr.mxu0 %v363
      %938 = vmatpush1.msra.mxu0 %v362
      %939 = vmatprep.subr.mxu0 %v367
      %940 = vmatpush1.msra.mxu0 %v366
      %941 = vmatprep.subr.mxu0 %v371
      %942 = vmatpush1.msra.mxu0 %v370
      %943 = vmatprep.subr.mxu0 %v375
      %944 = vmatpush1.msra.mxu0 %v374
      %945 = vmatprep.subr.mxu0 %v379
      %946 = vmatpush1.msra.mxu0 %v378
      %947 = vmatprep.subr.mxu0 %v383
      %948 = vmatpush1.msra.mxu0 %v382
      %949 = vmatprep.subr.mxu0 %v387
      %950 = vmatpush1.msra.mxu0 %v386
      %951 = vmatprep.subr.mxu0 %v391
      %952 = vmatpush1.msra.mxu0 %v390
      %953 = vmatprep.subr.mxu0 %v395
      %954 = vmatpush1.msra.mxu0 %v394
      %955 = vmatprep.subr.mxu0 %v399
      %956 = vmatpush1.msra.mxu0 %v398
      %957 = vmatprep.subr.mxu0 %v403
      %958 = vmatpush1.msra.mxu0 %v402
      %959 = vmatprep.subr.mxu0 %v407
      %960 = vmatpush1.msra.mxu0 %v406
      %961 = vmatprep.subr.mxu0 %v411
      %962 = vmatpush1.msra.mxu0 %v410
      %963 = vmatprep.subr.mxu0 %v415
      %964 = vmatpush1.msra.mxu0 %v414
      %965 = vmatprep.subr.mxu0 0.0
      %966 = vmatpush1.msra.mxu0 0.0
      %967 = vmatprep.subr.mxu0 0.0
      %968 = vmatpush1.msra.mxu0 0.0
      %969 = vmatprep.subr.mxu0 0.0
      %970 = vmatpush1.msra.mxu0 0.0
      %971 = vmatprep.subr.mxu0 0.0
      %972 = vmatpush1.msra.mxu0 0.0
      %973 = vmatprep.subr.mxu0 0.0
      %974 = vmatpush1.msra.mxu0 0.0
      %975 = vmatprep.subr.mxu0 0.0
      %976 = vmatpush1.msra.mxu0 0.0
      %977 = vmatprep.subr.mxu0 0.0
      %978 = vmatpush1.msra.mxu0 0.0
      %979 = vmatprep.subr.mxu0 0.0
      %980 = vmatpush1.msra.mxu0 0.0
      %981 = vmatprep.subr.mxu0 0.0
      %982 = vmatpush1.msra.mxu0 0.0
      %983 = vmatprep.subr.mxu0 0.0
      %984 = vmatpush1.msra.mxu0 0.0
      %985 = vmatprep.subr.mxu0 0.0
      %986 = vmatpush1.msra.mxu0 0.0
      %987 = vmatprep.subr.mxu0 0.0
      %988 = vmatpush1.msra.mxu0 0.0
      %989 = vmatprep.subr.mxu0 0.0
      %990 = vmatpush1.msra.mxu0 0.0
      %991 = vmatprep.subr.mxu0 0.0
      %992 = vmatpush1.msra.mxu0 0.0
      %993 = vmatprep.subr.mxu0 0.0
      %994 = vmatpush1.msra.mxu0 0.0
      %995 = vmatprep.subr.mxu0 0.0
      %996 = vmatpush1.msra.mxu0 0.0
      %997 = vmatprep.mubr.f32.mxu0 0.0
      %998 = vmatmul.mubr.f32.gmra.mrb[0].mxu0 %v932
      %v999 = vpop.f32.mrb[0].mxu0
      %v1000 = vadd.f32 0.0, %v999
      %v1001 = vpop.f32.mrb[0].mxu0
      %v1002 = vadd.f32 0.0, %v1001
      %1003 = vdwg.mxu0
      %1004 = vmatprep.subr.mxu0 %v357
      %1005 = vmatpush1.msra.mxu0 %v356
      %1006 = vmatprep.subr.mxu0 %v361
      %1007 = vmatpush1.msra.mxu0 %v360
      %1008 = vmatprep.subr.mxu0 %v365
      %1009 = vmatpush1.msra.mxu0 %v364
      %1010 = vmatprep.subr.mxu0 %v369
      %1011 = vmatpush1.msra.mxu0 %v368
      %1012 = vmatprep.subr.mxu0 %v373
      %1013 = vmatpush1.msra.mxu0 %v372
      %1014 = vmatprep.subr.mxu0 %v377
      %1015 = vmatpush1.msra.mxu0 %v376
      %1016 = vmatprep.subr.mxu0 %v381
      %1017 = vmatpush1.msra.mxu0 %v380
      %1018 = vmatprep.subr.mxu0 %v385
      %1019 = vmatpush1.msra.mxu0 %v384
      %1020 = vmatprep.subr.mxu0 %v389
      %1021 = vmatpush1.msra.mxu0 %v388
      %1022 = vmatprep.subr.mxu0 %v393
      %1023 = vmatpush1.msra.mxu0 %v392
      %1024 = vmatprep.subr.mxu0 %v397
      %1025 = vmatpush1.msra.mxu0 %v396
      %1026 = vmatprep.subr.mxu0 %v401
      %1027 = vmatpush1.msra.mxu0 %v400
      %1028 = vmatprep.subr.mxu0 %v405
      %1029 = vmatpush1.msra.mxu0 %v404
      %1030 = vmatprep.subr.mxu0 %v409
      %1031 = vmatpush1.msra.mxu0 %v408
      %1032 = vmatprep.subr.mxu0 %v413
      %1033 = vmatpush1.msra.mxu0 %v412
      %1034 = vmatprep.subr.mxu0 %v417
      %1035 = vmatpush1.msra.mxu0 %v416
      %1036 = vmatprep.subr.mxu0 0.0
      %1037 = vmatpush1.msra.mxu0 0.0
      %1038 = vmatprep.subr.mxu0 0.0
      %1039 = vmatpush1.msra.mxu0 0.0
      %1040 = vmatprep.subr.mxu0 0.0
      %1041 = vmatpush1.msra.mxu0 0.0
      %1042 = vmatprep.subr.mxu0 0.0
      %1043 = vmatpush1.msra.mxu0 0.0
      %1044 = vmatprep.subr.mxu0 0.0
      %1045 = vmatpush1.msra.mxu0 0.0
      %1046 = vmatprep.subr.mxu0 0.0
      %1047 = vmatpush1.msra.mxu0 0.0
      %1048 = vmatprep.subr.mxu0 0.0
      %1049 = vmatpush1.msra.mxu0 0.0
      %1050 = vmatprep.subr.mxu0 0.0
      %1051 = vmatpush1.msra.mxu0 0.0
      %1052 = vmatprep.subr.mxu0 0.0
      %1053 = vmatpush1.msra.mxu0 0.0
      %1054 = vmatprep.subr.mxu0 0.0
      %1055 = vmatpush1.msra.mxu0 0.0
      %1056 = vmatprep.subr.mxu0 0.0
      %1057 = vmatpush1.msra.mxu0 0.0
      %1058 = vmatprep.subr.mxu0 0.0
      %1059 = vmatpush1.msra.mxu0 0.0
      %1060 = vmatprep.subr.mxu0 0.0
      %1061 = vmatpush1.msra.mxu0 0.0
      %1062 = vmatprep.subr.mxu0 0.0
      %1063 = vmatpush1.msra.mxu0 0.0
      %1064 = vmatprep.subr.mxu0 0.0
      %1065 = vmatpush1.msra.mxu0 0.0
      %1066 = vmatprep.subr.mxu0 0.0
      %1067 = vmatpush1.msra.mxu0 0.0
      %1068 = vmatprep.mubr.f32.mxu0 0.0
      %1069 = vmatmul.mubr.f32.gmra.mrb[0].mxu0 %v932
      %v1070 = vpop.f32.mrb[0].mxu0
      %v1071 = vadd.f32 0.0, %v1070
      %v1072 = vpop.f32.mrb[0].mxu0
      %v1073 = vadd.f32 0.0, %v1072
      %1074 = vdwg.mxu0
      %v1075 = vadd.f32 %v928, %v1000
      %v1076 = vadd.f32 %v929, %v1002
      %v1077 = vadd.f32 %v930, %v1071
      %v1078 = vadd.f32 %v931, %v1073
      %v1079 = vld [vmem:[#allocation3] sm:$0xff]
      %v1080 = vmul.f32 %v921, 0.5
      %v1081 = vtanh.pop %v1080
      %v1082 = vmul.f32 %v1081, 0.5
      %v1083 = vadd.f32 %v1082, 0.5
      %v1084 = vmul.f32 %v922, 0.5
      %v1085 = vtanh.pop %v1084
      %v1086 = vmul.f32 %v1085, 0.5
      %v1087 = vadd.f32 %v1086, 0.5
      %v1088 = vtanh.pop %v923
      %v1089 = vmul.f32 %v924, 0.5
      %v1090 = vtanh.pop %v1089
      %v1091 = vmul.f32 %v1090, 0.5
      %v1092 = vadd.f32 %v1091, 0.5
      %v1093 = vmul.f32 %v1087, %v1079
      %v1094 = vmul.f32 %v1083, %v1088
      %v1095 = vadd.f32 %v1093, %v1094
      %v1096 = vtanh.pop %v1095
      %v1097 = vmul.f32 %v1092, %v1096
      %v1098 = vld [vmem:[#allocation5] sm:$0xff]
      %v1099 = vmul.f32 %v1075, 0.5
      %v1100 = vtanh.pop %v1099
      %v1101 = vmul.f32 %v1100, 0.5
      %v1102 = vadd.f32 %v1101, 0.5
      %v1103 = vmul.f32 %v1076, 0.5
      %v1104 = vtanh.pop %v1103
      %v1105 = vmul.f32 %v1104, 0.5
      %v1106 = vadd.f32 %v1105, 0.5
      %v1107 = vtanh.pop %v1077
      %v1108 = vmul.f32 %v1078, 0.5
      %v1109 = vtanh.pop %v1108
      %v1110 = vmul.f32 %v1109, 0.5
      %v1111 = vadd.f32 %v1110, 0.5
      %v1112 = vmul.f32 %v1106, %v1098
      %v1113 = vmul.f32 %v1102, %v1107
      %v1114 = vadd.f32 %v1112, %v1113
      %v1115 = vtanh.pop %v1114
      %v1116 = vmul.f32 %v1111, %v1115
      %1117 = vst [vmem:[#allocation2] sm:$0xff] %v1097
      %1118 = vst [vmem:[#allocation3] sm:$0xff] %v1095
      %1119 = vst [vmem:[#allocation4] sm:$0xff] %v1116
      %1120 = vst [vmem:[#allocation5] sm:$0xff] %v1114
      %s1121 = scalar_lea.vmem %s272, 8
      %1122 = vst [vmem:[%s1121] sm:$0xff] %v1097
      %s1123 = scalar_lea.vmem %s279, 16
      %1124 = vst [vmem:[%s1123] sm:$0xff] %v1116
      %s1125 = smul.addr %s925, 8
      %s1126 = scalar_lea.vmem %s257, %s1125
      %v1127 = vld [vmem:[%s1126] sm:$0xff]
      %v1128 = vld [vmem:[%s1126 + $0x8] sm:$0xff]
      %v1129 = vld [vmem:[%s1126 + $0x10] sm:$0xff]
      %v1130 = vld [vmem:[%s1126 + $0x18] sm:$0xff]
      %v1131 = vld [vmem:[#allocation2] sm:$0xff]
      %1132 = vmatprep.subr.mxu0 %v291
      %1133 = vmatpush1.msra.mxu0 %v290
      %1134 = vmatprep.subr.mxu0 %v295
      %1135 = vmatpush1.msra.mxu0 %v294
      %1136 = vmatprep.subr.mxu0 %v299
      %1137 = vmatpush1.msra.mxu0 %v298
      %1138 = vmatprep.subr.mxu0 %v303
      %1139 = vmatpush1.msra.mxu0 %v302
      %1140 = vmatprep.subr.mxu0 %v307
      %1141 = vmatpush1.msra.mxu0 %v306
      %1142 = vmatprep.subr.mxu0 %v311
      %1143 = vmatpush1.msra.mxu0 %v310
      %1144 = vmatprep.subr.mxu0 %v315
      %1145 = vmatpush1.msra.mxu0 %v314
      %1146 = vmatprep.subr.mxu0 %v319
      %1147 = vmatpush1.msra.mxu0 %v318
      %1148 = vmatprep.subr.mxu0 %v323
      %1149 = vmatpush1.msra.mxu0 %v322
      %1150 = vmatprep.subr.mxu0 %v327
      %1151 = vmatpush1.msra.mxu0 %v326
      %1152 = vmatprep.subr.mxu0 %v331
      %1153 = vmatpush1.msra.mxu0 %v330
      %1154 = vmatprep.subr.mxu0 %v335
      %1155 = vmatpush1.msra.mxu0 %v334
      %1156 = vmatprep.subr.mxu0 %v339
      %1157 = vmatpush1.msra.mxu0 %v338
      %1158 = vmatprep.subr.mxu0 %v343
      %1159 = vmatpush1.msra.mxu0 %v342
      %1160 = vmatprep.subr.mxu0 %v347
      %1161 = vmatpush1.msra.mxu0 %v346
      %1162 = vmatprep.subr.mxu0 %v351
      %1163 = vmatpush1.msra.mxu0 %v350
      %1164 = vmatprep.subr.mxu0 0.0
      %1165 = vmatpush1.msra.mxu0 0.0
      %1166 = vmatprep.subr.mxu0 0.0
      %1167 = vmatpush1.msra.mxu0 0.0
      %1168 = vmatprep.subr.mxu0 0.0
      %1169 = vmatpush1.msra.mxu0 0.0
      %1170 = vmatprep.subr.mxu0 0.0
      %1171 = vmatpush1.msra.mxu0 0.0
      %1172 = vmatprep.subr.mxu0 0.0
      %1173 = vmatpush1.msra.mxu0 0.0
      %1174 = vmatprep.subr.mxu0 0.0
      %1175 = vmatpush1.msra.mxu0 0.0
      %1176 = vmatprep.subr.mxu0 0.0
      %1177 = vmatpush1.msra.mxu0 0.0
      %1178 = vmatprep.subr.mxu0 0.0
      %1179 = vmatpush1.msra.mxu0 0.0
      %1180 = vmatprep.subr.mxu0 0.0
      %1181 = vmatpush1.msra.mxu0 0.0
      %1182 = vmatprep.subr.mxu0 0.0
      %1183 = vmatpush1.msra.mxu0 0.0
      %1184 = vmatprep.subr.mxu0 0.0
      %1185 = vmatpush1.msra.mxu0 0.0
      %1186 = vmatprep.subr.mxu0 0.0
      %1187 = vmatpush1.msra.mxu0 0.0
      %1188 = vmatprep.subr.mxu0 0.0
      %1189 = vmatpush1.msra.mxu0 0.0
      %1190 = vmatprep.subr.mxu0 0.0
      %1191 = vmatpush1.msra.mxu0 0.0
      %1192 = vmatprep.subr.mxu0 0.0
      %1193 = vmatpush1.msra.mxu0 0.0
      %1194 = vmatprep.subr.mxu0 0.0
      %1195 = vmatpush1.msra.mxu0 0.0
      %1196 = vmatprep.mubr.f32.mxu0 0.0
      %1197 = vmatmul.mubr.f32.gmra.mrb[0].mxu0 %v1131
      %v1198 = vpop.f32.mrb[0].mxu0
      %v1199 = vadd.f32 0.0, %v1198
      %v1200 = vpop.f32.mrb[0].mxu0
      %v1201 = vadd.f32 0.0, %v1200
      %1202 = vdwg.mxu0
      %1203 = vmatprep.subr.mxu0 %v293
      %1204 = vmatpush1.msra.mxu0 %v292
      %1205 = vmatprep.subr.mxu0 %v297
      %1206 = vmatpush1.msra.mxu0 %v296
      %1207 = vmatprep.subr.mxu0 %v301
      %1208 = vmatpush1.msra.mxu0 %v300
      %1209 = vmatprep.subr.mxu0 %v305
      %1210 = vmatpush1.msra.mxu0 %v304
      %1211 = vmatprep.subr.mxu0 %v309
      %1212 = vmatpush1.msra.mxu0 %v308
      %1213 = vmatprep.subr.mxu0 %v313
      %1214 = vmatpush1.msra.mxu0 %v312
      %1215 = vmatprep.subr.mxu0 %v317
      %1216 = vmatpush1.msra.mxu0 %v316
      %1217 = vmatprep.subr.mxu0 %v321
      %1218 = vmatpush1.msra.mxu0 %v320
      %1219 = vmatprep.subr.mxu0 %v325
      %1220 = vmatpush1.msra.mxu0 %v324
      %1221 = vmatprep.subr.mxu0 %v329
      %1222 = vmatpush1.msra.mxu0 %v328
      %1223 = vmatprep.subr.mxu0 %v333
      %1224 = vmatpush1.msra.mxu0 %v332
      %1225 = vmatprep.subr.mxu0 %v337
      %1226 = vmatpush1.msra.mxu0 %v336
      %1227 = vmatprep.subr.mxu0 %v341
      %1228 = vmatpush1.msra.mxu0 %v340
      %1229 = vmatprep.subr.mxu0 %v345
      %1230 = vmatpush1.msra.mxu0 %v344
      %1231 = vmatprep.subr.mxu0 %v349
      %1232 = vmatpush1.msra.mxu0 %v348
      %1233 = vmatprep.subr.mxu0 %v353
      %1234 = vmatpush1.msra.mxu0 %v352
      %1235 = vmatprep.subr.mxu0 0.0
      %1236 = vmatpush1.msra.mxu0 0.0
      %1237 = vmatprep.subr.mxu0 0.0
      %1238 = vmatpush1.msra.mxu0 0.0
      %1239 = vmatprep.subr.mxu0 0.0
      %1240 = vmatpush1.msra.mxu0 0.0
      %1241 = vmatprep.subr.mxu0 0.0
      %1242 = vmatpush1.msra.mxu0 0.0
      %1243 = vmatprep.subr.mxu0 0.0
      %1244 = vmatpush1.msra.mxu0 0.0
      %1245 = vmatprep.subr.mxu0 0.0
      %1246 = vmatpush1.msra.mxu0 0.0
      %1247 = vmatprep.subr.mxu0 0.0
      %1248 = vmatpush1.msra.mxu0 0.0
      %1249 = vmatprep.subr.mxu0 0.0
      %1250 = vmatpush1.msra.mxu0 0.0
      %1251 = vmatprep.subr.mxu0 0.0
      %1252 = vmatpush1.msra.mxu0 0.0
      %1253 = vmatprep.subr.mxu0 0.0
      %1254 = vmatpush1.msra.mxu0 0.0
      %1255 = vmatprep.subr.mxu0 0.0
      %1256 = vmatpush1.msra.mxu0 0.0
      %1257 = vmatprep.subr.mxu0 0.0
      %1258 = vmatpush1.msra.mxu0 0.0
      %1259 = vmatprep.subr.mxu0 0.0
      %1260 = vmatpush1.msra.mxu0 0.0
      %1261 = vmatprep.subr.mxu0 0.0
      %1262 = vmatpush1.msra.mxu0 0.0
      %1263 = vmatprep.subr.mxu0 0.0
      %1264 = vmatpush1.msra.mxu0 0.0
      %1265 = vmatprep.subr.mxu0 0.0
      %1266 = vmatpush1.msra.mxu0 0.0
      %1267 = vmatprep.mubr.f32.mxu0 0.0
      %1268 = vmatmul.mubr.f32.gmra.mrb[0].mxu0 %v1131
      %v1269 = vpop.f32.mrb[0].mxu0
      %v1270 = vadd.f32 0.0, %v1269
      %v1271 = vpop.f32.mrb[0].mxu0
      %v1272 = vadd.f32 0.0, %v1271
      %1273 = vdwg.mxu0
      %v1274 = vadd.f32 %v1127, %v1199
      %v1275 = vadd.f32 %v1128, %v1201
      %v1276 = vadd.f32 %v1129, %v1270
      %v1277 = vadd.f32 %v1130, %v1272
      %s1278 = smul.addr %s771, 8
      %s1279 = scalar_lea.vmem %s265, %s1278
      %v1280 = vld [vmem:[%s1279] sm:$0xff]
      %v1281 = vld [vmem:[%s1279 + $0x8] sm:$0xff]
      %v1282 = vld [vmem:[%s1279 + $0x10] sm:$0xff]
      %v1283 = vld [vmem:[%s1279 + $0x18] sm:$0xff]
      %v1284 = vld [vmem:[#allocation4] sm:$0xff]
      %1285 = vmatprep.subr.mxu0 %v355
      %1286 = vmatpush1.msra.mxu0 %v354
      %1287 = vmatprep.subr.mxu0 %v359
      %1288 = vmatpush1.msra.mxu0 %v358
      %1289 = vmatprep.subr.mxu0 %v363
      %1290 = vmatpush1.msra.mxu0 %v362
      %1291 = vmatprep.subr.mxu0 %v367
      %1292 = vmatpush1.msra.mxu0 %v366
      %1293 = vmatprep.subr.mxu0 %v371
      %1294 = vmatpush1.msra.mxu0 %v370
      %1295 = vmatprep.subr.mxu0 %v375
      %1296 = vmatpush1.msra.mxu0 %v374
      %1297 = vmatprep.subr.mxu0 %v379
      %1298 = vmatpush1.msra.mxu0 %v378
      %1299 = vmatprep.subr.mxu0 %v383
      %1300 = vmatpush1.msra.mxu0 %v382
      %1301 = vmatprep.subr.mxu0 %v387
      %1302 = vmatpush1.msra.mxu0 %v386
      %1303 = vmatprep.subr.mxu0 %v391
      %1304 = vmatpush1.msra.mxu0 %v390
      %1305 = vmatprep.subr.mxu0 %v395
      %1306 = vmatpush1.msra.mxu0 %v394
      %1307 = vmatprep.subr.mxu0 %v399
      %1308 = vmatpush1.msra.mxu0 %v398
      %1309 = vmatprep.subr.mxu0 %v403
      %1310 = vmatpush1.msra.mxu0 %v402
      %1311 = vmatprep.subr.mxu0 %v407
      %1312 = vmatpush1.msra.mxu0 %v406
      %1313 = vmatprep.subr.mxu0 %v411
      %1314 = vmatpush1.msra.mxu0 %v410
      %1315 = vmatprep.subr.mxu0 %v415
      %1316 = vmatpush1.msra.mxu0 %v414
      %1317 = vmatprep.subr.mxu0 0.0
      %1318 = vmatpush1.msra.mxu0 0.0
      %1319 = vmatprep.subr.mxu0 0.0
      %1320 = vmatpush1.msra.mxu0 0.0
      %1321 = vmatprep.subr.mxu0 0.0
      %1322 = vmatpush1.msra.mxu0 0.0
      %1323 = vmatprep.subr.mxu0 0.0
      %1324 = vmatpush1.msra.mxu0 0.0
      %1325 = vmatprep.subr.mxu0 0.0
      %1326 = vmatpush1.msra.mxu0 0.0
      %1327 = vmatprep.subr.mxu0 0.0
      %1328 = vmatpush1.msra.mxu0 0.0
      %1329 = vmatprep.subr.mxu0 0.0
      %1330 = vmatpush1.msra.mxu0 0.0
      %1331 = vmatprep.subr.mxu0 0.0
      %1332 = vmatpush1.msra.mxu0 0.0
      %1333 = vmatprep.subr.mxu0 0.0
      %1334 = vmatpush1.msra.mxu0 0.0
      %1335 = vmatprep.subr.mxu0 0.0
      %1336 = vmatpush1.msra.mxu0 0.0
      %1337 = vmatprep.subr.mxu0 0.0
      %1338 = vmatpush1.msra.mxu0 0.0
      %1339 = vmatprep.subr.mxu0 0.0
      %1340 = vmatpush1.msra.mxu0 0.0
      %1341 = vmatprep.subr.mxu0 0.0
      %1342 = vmatpush1.msra.mxu0 0.0
      %1343 = vmatprep.subr.mxu0 0.0
      %1344 = vmatpush1.msra.mxu0 0.0
      %1345 = vmatprep.subr.mxu0 0.0
      %1346 = vmatpush1.msra.mxu0 0.0
      %1347 = vmatprep.subr.mxu0 0.0
      %1348 = vmatpush1.msra.mxu0 0.0
      %1349 = vmatprep.mubr.f32.mxu0 0.0
      %1350 = vmatmul.mubr.f32.gmra.mrb[0].mxu0 %v1284
      %v1351 = vpop.f32.mrb[0].mxu0
      %v1352 = vadd.f32 0.0, %v1351
      %v1353 = vpop.f32.mrb[0].mxu0
      %v1354 = vadd.f32 0.0, %v1353
      %1355 = vdwg.mxu0
      %1356 = vmatprep.subr.mxu0 %v357
      %1357 = vmatpush1.msra.mxu0 %v356
      %1358 = vmatprep.subr.mxu0 %v361
      %1359 = vmatpush1.msra.mxu0 %v360
      %1360 = vmatprep.subr.mxu0 %v365
      %1361 = vmatpush1.msra.mxu0 %v364
      %1362 = vmatprep.subr.mxu0 %v369
      %1363 = vmatpush1.msra.mxu0 %v368
      %1364 = vmatprep.subr.mxu0 %v373
      %1365 = vmatpush1.msra.mxu0 %v372
      %1366 = vmatprep.subr.mxu0 %v377
      %1367 = vmatpush1.msra.mxu0 %v376
      %1368 = vmatprep.subr.mxu0 %v381
      %1369 = vmatpush1.msra.mxu0 %v380
      %1370 = vmatprep.subr.mxu0 %v385
      %1371 = vmatpush1.msra.mxu0 %v384
      %1372 = vmatprep.subr.mxu0 %v389
      %1373 = vmatpush1.msra.mxu0 %v388
      %1374 = vmatprep.subr.mxu0 %v393
      %1375 = vmatpush1.msra.mxu0 %v392
      %1376 = vmatprep.subr.mxu0 %v397
      %1377 = vmatpush1.msra.mxu0 %v396
      %1378 = vmatprep.subr.mxu0 %v401
      %1379 = vmatpush1.msra.mxu0 %v400
      %1380 = vmatprep.subr.mxu0 %v405
      %1381 = vmatpush1.msra.mxu0 %v404
      %1382 = vmatprep.subr.mxu0 %v409
      %1383 = vmatpush1.msra.mxu0 %v408
      %1384 = vmatprep.subr.mxu0 %v413
      %1385 = vmatpush1.msra.mxu0 %v412
      %1386 = vmatprep.subr.mxu0 %v417
      %1387 = vmatpush1.msra.mxu0 %v416
      %1388 = vmatprep.subr.mxu0 0.0
      %1389 = vmatpush1.msra.mxu0 0.0
      %1390 = vmatprep.subr.mxu0 0.0
      %1391 = vmatpush1.msra.mxu0 0.0
      %1392 = vmatprep.subr.mxu0 0.0
      %1393 = vmatpush1.msra.mxu0 0.0
      %1394 = vmatprep.subr.mxu0 0.0
      %1395 = vmatpush1.msra.mxu0 0.0
      %1396 = vmatprep.subr.mxu0 0.0
      %1397 = vmatpush1.msra.mxu0 0.0
      %1398 = vmatprep.subr.mxu0 0.0
      %1399 = vmatpush1.msra.mxu0 0.0
      %1400 = vmatprep.subr.mxu0 0.0
      %1401 = vmatpush1.msra.mxu0 0.0
      %1402 = vmatprep.subr.mxu0 0.0
      %1403 = vmatpush1.msra.mxu0 0.0
      %1404 = vmatprep.subr.mxu0 0.0
      %1405 = vmatpush1.msra.mxu0 0.0
      %1406 = vmatprep.subr.mxu0 0.0
      %1407 = vmatpush1.msra.mxu0 0.0
      %1408 = vmatprep.subr.mxu0 0.0
      %1409 = vmatpush1.msra.mxu0 0.0
      %1410 = vmatprep.subr.mxu0 0.0
      %1411 = vmatpush1.msra.mxu0 0.0
      %1412 = vmatprep.subr.mxu0 0.0
      %1413 = vmatpush1.msra.mxu0 0.0
      %1414 = vmatprep.subr.mxu0 0.0
      %1415 = vmatpush1.msra.mxu0 0.0
      %1416 = vmatprep.subr.mxu0 0.0
      %1417 = vmatpush1.msra.mxu0 0.0
      %1418 = vmatprep.subr.mxu0 0.0
      %1419 = vmatpush1.msra.mxu0 0.0
      %1420 = vmatprep.mubr.f32.mxu0 0.0
      %1421 = vmatmul.mubr.f32.gmra.mrb[0].mxu0 %v1284
      %v1422 = vpop.f32.mrb[0].mxu0
      %v1423 = vadd.f32 0.0, %v1422
      %v1424 = vpop.f32.mrb[0].mxu0
      %v1425 = vadd.f32 0.0, %v1424
      %1426 = vdwg.mxu0
      %v1427 = vadd.f32 %v1280, %v1352
      %v1428 = vadd.f32 %v1281, %v1354
      %v1429 = vadd.f32 %v1282, %v1423
      %v1430 = vadd.f32 %v1283, %v1425
      %v1431 = vld [vmem:[#allocation3] sm:$0xff]
      %v1432 = vmul.f32 %v1274, 0.5
      %v1433 = vtanh.pop %v1432
      %v1434 = vmul.f32 %v1433, 0.5
      %v1435 = vadd.f32 %v1434, 0.5
      %v1436 = vmul.f32 %v1275, 0.5
      %v1437 = vtanh.pop %v1436
      %v1438 = vmul.f32 %v1437, 0.5
      %v1439 = vadd.f32 %v1438, 0.5
      %v1440 = vtanh.pop %v1276
      %v1441 = vmul.f32 %v1277, 0.5
      %v1442 = vtanh.pop %v1441
      %v1443 = vmul.f32 %v1442, 0.5
      %v1444 = vadd.f32 %v1443, 0.5
      %v1445 = vmul.f32 %v1439, %v1431
      %v1446 = vmul.f32 %v1435, %v1440
      %v1447 = vadd.f32 %v1445, %v1446
      %v1448 = vtanh.pop %v1447
      %v1449 = vmul.f32 %v1444, %v1448
      %v1450 = vld [vmem:[#allocation5] sm:$0xff]
      %v1451 = vmul.f32 %v1427, 0.5
      %v1452 = vtanh.pop %v1451
      %v1453 = vmul.f32 %v1452, 0.5
      %v1454 = vadd.f32 %v1453, 0.5
      %v1455 = vmul.f32 %v1428, 0.5
      %v1456 = vtanh.pop %v1455
      %v1457 = vmul.f32 %v1456, 0.5
      %v1458 = vadd.f32 %v1457, 0.5
      %v1459 = vtanh.pop %v1429
      %v1460 = vmul.f32 %v1430, 0.5
      %v1461 = vtanh.pop %v1460
      %v1462 = vmul.f32 %v1461, 0.5
      %v1463 = vadd.f32 %v1462, 0.5
      %v1464 = vmul.f32 %v1458, %v1450
      %v1465 = vmul.f32 %v1454, %v1459
      %v1466 = vadd.f32 %v1464, %v1465
      %v1467 = vtanh.pop %v1466
      %v1468 = vmul.f32 %v1463, %v1467
      %1469 = vst [vmem:[#allocation2] sm:$0xff] %v1449
      %1470 = vst [vmem:[#allocation3] sm:$0xff] %v1447
      %1471 = vst [vmem:[#allocation4] sm:$0xff] %v1468
      %1472 = vst [vmem:[#allocation5] sm:$0xff] %v1466
      %s1473 = scalar_lea.vmem %s272, 16
      %1474 = vst [vmem:[%s1473] sm:$0xff] %v1449
      %s1475 = scalar_lea.vmem %s279, 8
      %1476 = vst [vmem:[%s1475] sm:$0xff] %v1468
      %s1477 = smul.addr %s572, 8
      %s1478 = scalar_lea.vmem %s257, %s1477
      %v1479 = vld [vmem:[%s1478] sm:$0xff]
      %v1480 = vld [vmem:[%s1478 + $0x8] sm:$0xff]
      %v1481 = vld [vmem:[%s1478 + $0x10] sm:$0xff]
      %v1482 = vld [vmem:[%s1478 + $0x18] sm:$0xff]
      %v1483 = vld [vmem:[#allocation2] sm:$0xff]
      %1484 = vmatprep.subr.mxu0 %v291
      %1485 = vmatpush1.msra.mxu0 %v290
      %1486 = vmatprep.subr.mxu0 %v295
      %1487 = vmatpush1.msra.mxu0 %v294
      %1488 = vmatprep.subr.mxu0 %v299
      %1489 = vmatpush1.msra.mxu0 %v298
      %1490 = vmatprep.subr.mxu0 %v303
      %1491 = vmatpush1.msra.mxu0 %v302
      %1492 = vmatprep.subr.mxu0 %v307
      %1493 = vmatpush1.msra.mxu0 %v306
      %1494 = vmatprep.subr.mxu0 %v311
      %1495 = vmatpush1.msra.mxu0 %v310
      %1496 = vmatprep.subr.mxu0 %v315
      %1497 = vmatpush1.msra.mxu0 %v314
      %1498 = vmatprep.subr.mxu0 %v319
      %1499 = vmatpush1.msra.mxu0 %v318
      %1500 = vmatprep.subr.mxu0 %v323
      %1501 = vmatpush1.msra.mxu0 %v322
      %1502 = vmatprep.subr.mxu0 %v327
      %1503 = vmatpush1.msra.mxu0 %v326
      %1504 = vmatprep.subr.mxu0 %v331
      %1505 = vmatpush1.msra.mxu0 %v330
      %1506 = vmatprep.subr.mxu0 %v335
      %1507 = vmatpush1.msra.mxu0 %v334
      %1508 = vmatprep.subr.mxu0 %v339
      %1509 = vmatpush1.msra.mxu0 %v338
      %1510 = vmatprep.subr.mxu0 %v343
      %1511 = vmatpush1.msra.mxu0 %v342
      %1512 = vmatprep.subr.mxu0 %v347
      %1513 = vmatpush1.msra.mxu0 %v346
      %1514 = vmatprep.subr.mxu0 %v351
      %1515 = vmatpush1.msra.mxu0 %v350
      %1516 = vmatprep.subr.mxu0 0.0
      %1517 = vmatpush1.msra.mxu0 0.0
      %1518 = vmatprep.subr.mxu0 0.0
      %1519 = vmatpush1.msra.mxu0 0.0
      %1520 = vmatprep.subr.mxu0 0.0
      %1521 = vmatpush1.msra.mxu0 0.0
      %1522 = vmatprep.subr.mxu0 0.0
      %1523 = vmatpush1.msra.mxu0 0.0
      %1524 = vmatprep.subr.mxu0 0.0
      %1525 = vmatpush1.msra.mxu0 0.0
      %1526 = vmatprep.subr.mxu0 0.0
      %1527 = vmatpush1.msra.mxu0 0.0
      %1528 = vmatprep.subr.mxu0 0.0
      %1529 = vmatpush1.msra.mxu0 0.0
      %1530 = vmatprep.subr.mxu0 0.0
      %1531 = vmatpush1.msra.mxu0 0.0
      %1532 = vmatprep.subr.mxu0 0.0
      %1533 = vmatpush1.msra.mxu0 0.0
      %1534 = vmatprep.subr.mxu0 0.0
      %1535 = vmatpush1.msra.mxu0 0.0
      %1536 = vmatprep.subr.mxu0 0.0
      %1537 = vmatpush1.msra.mxu0 0.0
      %1538 = vmatprep.subr.mxu0 0.0
      %1539 = vmatpush1.msra.mxu0 0.0
      %1540 = vmatprep.subr.mxu0 0.0
      %1541 = vmatpush1.msra.mxu0 0.0
      %1542 = vmatprep.subr.mxu0 0.0
      %1543 = vmatpush1.msra.mxu0 0.0
      %1544 = vmatprep.subr.mxu0 0.0
      %1545 = vmatpush1.msra.mxu0 0.0
      %1546 = vmatprep.subr.mxu0 0.0
      %1547 = vmatpush1.msra.mxu0 0.0
      %1548 = vmatprep.mubr.f32.mxu0 0.0
      %1549 = vmatmul.mubr.f32.gmra.mrb[0].mxu0 %v1483
      %v1550 = vpop.f32.mrb[0].mxu0
      %v1551 = vadd.f32 0.0, %v1550
      %v1552 = vpop.f32.mrb[0].mxu0
      %v1553 = vadd.f32 0.0, %v1552
      %1554 = vdwg.mxu0
      %1555 = vmatprep.subr.mxu0 %v293
      %1556 = vmatpush1.msra.mxu0 %v292
      %1557 = vmatprep.subr.mxu0 %v297
      %1558 = vmatpush1.msra.mxu0 %v296
      %1559 = vmatprep.subr.mxu0 %v301
      %1560 = vmatpush1.msra.mxu0 %v300
      %1561 = vmatprep.subr.mxu0 %v305
      %1562 = vmatpush1.msra.mxu0 %v304
      %1563 = vmatprep.subr.mxu0 %v309
      %1564 = vmatpush1.msra.mxu0 %v308
      %1565 = vmatprep.subr.mxu0 %v313
      %1566 = vmatpush1.msra.mxu0 %v312
      %1567 = vmatprep.subr.mxu0 %v317
      %1568 = vmatpush1.msra.mxu0 %v316
      %1569 = vmatprep.subr.mxu0 %v321
      %1570 = vmatpush1.msra.mxu0 %v320
      %1571 = vmatprep.subr.mxu0 %v325
      %1572 = vmatpush1.msra.mxu0 %v324
      %1573 = vmatprep.subr.mxu0 %v329
      %1574 = vmatpush1.msra.mxu0 %v328
      %1575 = vmatprep.subr.mxu0 %v333
      %1576 = vmatpush1.msra.mxu0 %v332
      %1577 = vmatprep.subr.mxu0 %v337
      %1578 = vmatpush1.msra.mxu0 %v336
      %1579 = vmatprep.subr.mxu0 %v341
      %1580 = vmatpush1.msra.mxu0 %v340
      %1581 = vmatprep.subr.mxu0 %v345
      %1582 = vmatpush1.msra.mxu0 %v344
      %1583 = vmatprep.subr.mxu0 %v349
      %1584 = vmatpush1.msra.mxu0 %v348
      %1585 = vmatprep.subr.mxu0 %v353
      %1586 = vmatpush1.msra.mxu0 %v352
      %1587 = vmatprep.subr.mxu0 0.0
      %1588 = vmatpush1.msra.mxu0 0.0
      %1589 = vmatprep.subr.mxu0 0.0
      %1590 = vmatpush1.msra.mxu0 0.0
      %1591 = vmatprep.subr.mxu0 0.0
      %1592 = vmatpush1.msra.mxu0 0.0
      %1593 = vmatprep.subr.mxu0 0.0
      %1594 = vmatpush1.msra.mxu0 0.0
      %1595 = vmatprep.subr.mxu0 0.0
      %1596 = vmatpush1.msra.mxu0 0.0
      %1597 = vmatprep.subr.mxu0 0.0
      %1598 = vmatpush1.msra.mxu0 0.0
      %1599 = vmatprep.subr.mxu0 0.0
      %1600 = vmatpush1.msra.mxu0 0.0
      %1601 = vmatprep.subr.mxu0 0.0
      %1602 = vmatpush1.msra.mxu0 0.0
      %1603 = vmatprep.subr.mxu0 0.0
      %1604 = vmatpush1.msra.mxu0 0.0
      %1605 = vmatprep.subr.mxu0 0.0
      %1606 = vmatpush1.msra.mxu0 0.0
      %1607 = vmatprep.subr.mxu0 0.0
      %1608 = vmatpush1.msra.mxu0 0.0
      %1609 = vmatprep.subr.mxu0 0.0
      %1610 = vmatpush1.msra.mxu0 0.0
      %1611 = vmatprep.subr.mxu0 0.0
      %1612 = vmatpush1.msra.mxu0 0.0
      %1613 = vmatprep.subr.mxu0 0.0
      %1614 = vmatpush1.msra.mxu0 0.0
      %1615 = vmatprep.subr.mxu0 0.0
      %1616 = vmatpush1.msra.mxu0 0.0
      %1617 = vmatprep.subr.mxu0 0.0
      %1618 = vmatpush1.msra.mxu0 0.0
      %1619 = vmatprep.mubr.f32.mxu0 0.0
      %1620 = vmatmul.mubr.f32.gmra.mrb[0].mxu0 %v1483
      %v1621 = vpop.f32.mrb[0].mxu0
      %v1622 = vadd.f32 0.0, %v1621
      %v1623 = vpop.f32.mrb[0].mxu0
      %v1624 = vadd.f32 0.0, %v1623
      %1625 = vdwg.mxu0
      %v1626 = vadd.f32 %v1479, %v1551
      %v1627 = vadd.f32 %v1480, %v1553
      %v1628 = vadd.f32 %v1481, %v1622
      %v1629 = vadd.f32 %v1482, %v1624
      %s1630 = smul.addr %s418, 8
      %s1631 = scalar_lea.vmem %s265, %s1630
      %v1632 = vld [vmem:[%s1631] sm:$0xff]
      %v1633 = vld [vmem:[%s1631 + $0x8] sm:$0xff]
      %v1634 = vld [vmem:[%s1631 + $0x10] sm:$0xff]
      %v1635 = vld [vmem:[%s1631 + $0x18] sm:$0xff]
      %v1636 = vld [vmem:[#allocation4] sm:$0xff]
      %1637 = vmatprep.subr.mxu0 %v355
      %1638 = vmatpush1.msra.mxu0 %v354
      %1639 = vmatprep.subr.mxu0 %v359
      %1640 = vmatpush1.msra.mxu0 %v358
      %1641 = vmatprep.subr.mxu0 %v363
      %1642 = vmatpush1.msra.mxu0 %v362
      %1643 = vmatprep.subr.mxu0 %v367
      %1644 = vmatpush1.msra.mxu0 %v366
      %1645 = vmatprep.subr.mxu0 %v371
      %1646 = vmatpush1.msra.mxu0 %v370
      %1647 = vmatprep.subr.mxu0 %v375
      %1648 = vmatpush1.msra.mxu0 %v374
      %1649 = vmatprep.subr.mxu0 %v379
      %1650 = vmatpush1.msra.mxu0 %v378
      %1651 = vmatprep.subr.mxu0 %v383
      %1652 = vmatpush1.msra.mxu0 %v382
      %1653 = vmatprep.subr.mxu0 %v387
      %1654 = vmatpush1.msra.mxu0 %v386
      %1655 = vmatprep.subr.mxu0 %v391
      %1656 = vmatpush1.msra.mxu0 %v390
      %1657 = vmatprep.subr.mxu0 %v395
      %1658 = vmatpush1.msra.mxu0 %v394
      %1659 = vmatprep.subr.mxu0 %v399
      %1660 = vmatpush1.msra.mxu0 %v398
      %1661 = vmatprep.subr.mxu0 %v403
      %1662 = vmatpush1.msra.mxu0 %v402
      %1663 = vmatprep.subr.mxu0 %v407
      %1664 = vmatpush1.msra.mxu0 %v406
      %1665 = vmatprep.subr.mxu0 %v411
      %1666 = vmatpush1.msra.mxu0 %v410
      %1667 = vmatprep.subr.mxu0 %v415
      %1668 = vmatpush1.msra.mxu0 %v414
      %1669 = vmatprep.subr.mxu0 0.0
      %1670 = vmatpush1.msra.mxu0 0.0
      %1671 = vmatprep.subr.mxu0 0.0
      %1672 = vmatpush1.msra.mxu0 0.0
      %1673 = vmatprep.subr.mxu0 0.0
      %1674 = vmatpush1.msra.mxu0 0.0
      %1675 = vmatprep.subr.mxu0 0.0
      %1676 = vmatpush1.msra.mxu0 0.0
      %1677 = vmatprep.subr.mxu0 0.0
      %1678 = vmatpush1.msra.mxu0 0.0
      %1679 = vmatprep.subr.mxu0 0.0
      %1680 = vmatpush1.msra.mxu0 0.0
      %1681 = vmatprep.subr.mxu0 0.0
      %1682 = vmatpush1.msra.mxu0 0.0
      %1683 = vmatprep.subr.mxu0 0.0
      %1684 = vmatpush1.msra.mxu0 0.0
      %1685 = vmatprep.subr.mxu0 0.0
      %1686 = vmatpush1.msra.mxu0 0.0
      %1687 = vmatprep.subr.mxu0 0.0
      %1688 = vmatpush1.msra.mxu0 0.0
      %1689 = vmatprep.subr.mxu0 0.0
      %1690 = vmatpush1.msra.mxu0 0.0
      %1691 = vmatprep.subr.mxu0 0.0
      %1692 = vmatpush1.msra.mxu0 0.0
      %1693 = vmatprep.subr.mxu0 0.0
      %1694 = vmatpush1.msra.mxu0 0.0
      %1695 = vmatprep.subr.mxu0 0.0
      %1696 = vmatpush1.msra.mxu0 0.0
      %1697 = vmatprep.subr.mxu0 0.0
      %1698 = vmatpush1.msra.mxu0 0.0
      %1699 = vmatprep.subr.mxu0 0.0
      %1700 = vmatpush1.msra.mxu0 0.0
      %1701 = vmatprep.mubr.f32.mxu0 0.0
      %1702 = vmatmul.mubr.f32.gmra.mrb[0].mxu0 %v1636
      %v1703 = vpop.f32.mrb[0].mxu0
      %v1704 = vadd.f32 0.0, %v1703
      %v1705 = vpop.f32.mrb[0].mxu0
      %v1706 = vadd.f32 0.0, %v1705
      %1707 = vdwg.mxu0
      %1708 = vmatprep.subr.mxu0 %v357
      %1709 = vmatpush1.msra.mxu0 %v356
      %1710 = vmatprep.subr.mxu0 %v361
      %1711 = vmatpush1.msra.mxu0 %v360
      %1712 = vmatprep.subr.mxu0 %v365
      %1713 = vmatpush1.msra.mxu0 %v364
      %1714 = vmatprep.subr.mxu0 %v369
      %1715 = vmatpush1.msra.mxu0 %v368
      %1716 = vmatprep.subr.mxu0 %v373
      %1717 = vmatpush1.msra.mxu0 %v372
      %1718 = vmatprep.subr.mxu0 %v377
      %1719 = vmatpush1.msra.mxu0 %v376
      %1720 = vmatprep.subr.mxu0 %v381
      %1721 = vmatpush1.msra.mxu0 %v380
      %1722 = vmatprep.subr.mxu0 %v385
      %1723 = vmatpush1.msra.mxu0 %v384
      %1724 = vmatprep.subr.mxu0 %v389
      %1725 = vmatpush1.msra.mxu0 %v388
      %1726 = vmatprep.subr.mxu0 %v393
      %1727 = vmatpush1.msra.mxu0 %v392
      %1728 = vmatprep.subr.mxu0 %v397
      %1729 = vmatpush1.msra.mxu0 %v396
      %1730 = vmatprep.subr.mxu0 %v401
      %1731 = vmatpush1.msra.mxu0 %v400
      %1732 = vmatprep.subr.mxu0 %v405
      %1733 = vmatpush1.msra.mxu0 %v404
      %1734 = vmatprep.subr.mxu0 %v409
      %1735 = vmatpush1.msra.mxu0 %v408
      %1736 = vmatprep.subr.mxu0 %v413
      %1737 = vmatpush1.msra.mxu0 %v412
      %1738 = vmatprep.subr.mxu0 %v417
      %1739 = vmatpush1.msra.mxu0 %v416
      %1740 = vmatprep.subr.mxu0 0.0
      %1741 = vmatpush1.msra.mxu0 0.0
      %1742 = vmatprep.subr.mxu0 0.0
      %1743 = vmatpush1.msra.mxu0 0.0
      %1744 = vmatprep.subr.mxu0 0.0
      %1745 = vmatpush1.msra.mxu0 0.0
      %1746 = vmatprep.subr.mxu0 0.0
      %1747 = vmatpush1.msra.mxu0 0.0
      %1748 = vmatprep.subr.mxu0 0.0
      %1749 = vmatpush1.msra.mxu0 0.0
      %1750 = vmatprep.subr.mxu0 0.0
      %1751 = vmatpush1.msra.mxu0 0.0
      %1752 = vmatprep.subr.mxu0 0.0
      %1753 = vmatpush1.msra.mxu0 0.0
      %1754 = vmatprep.subr.mxu0 0.0
      %1755 = vmatpush1.msra.mxu0 0.0
      %1756 = vmatprep.subr.mxu0 0.0
      %1757 = vmatpush1.msra.mxu0 0.0
      %1758 = vmatprep.subr.mxu0 0.0
      %1759 = vmatpush1.msra.mxu0 0.0
      %1760 = vmatprep.subr.mxu0 0.0
      %1761 = vmatpush1.msra.mxu0 0.0
      %1762 = vmatprep.subr.mxu0 0.0
      %1763 = vmatpush1.msra.mxu0 0.0
      %1764 = vmatprep.subr.mxu0 0.0
      %1765 = vmatpush1.msra.mxu0 0.0
      %1766 = vmatprep.subr.mxu0 0.0
      %1767 = vmatpush1.msra.mxu0 0.0
      %1768 = vmatprep.subr.mxu0 0.0
      %1769 = vmatpush1.msra.mxu0 0.0
      %1770 = vmatprep.subr.mxu0 0.0
      %1771 = vmatpush1.msra.mxu0 0.0
      %1772 = vmatprep.mubr.f32.mxu0 0.0
      %1773 = vmatmul.mubr.f32.gmra.mrb[0].mxu0 %v1636
      %v1774 = vpop.f32.mrb[0].mxu0
      %v1775 = vadd.f32 0.0, %v1774
      %v1776 = vpop.f32.mrb[0].mxu0
      %v1777 = vadd.f32 0.0, %v1776
      %1778 = vdwg.mxu0
      %v1779 = vadd.f32 %v1632, %v1704
      %v1780 = vadd.f32 %v1633, %v1706
      %v1781 = vadd.f32 %v1634, %v1775
      %v1782 = vadd.f32 %v1635, %v1777
      %v1783 = vld [vmem:[#allocation3] sm:$0xff]
      %v1784 = vmul.f32 %v1626, 0.5
      %v1785 = vtanh.pop %v1784
      %v1786 = vmul.f32 %v1785, 0.5
      %v1787 = vadd.f32 %v1786, 0.5
      %v1788 = vmul.f32 %v1627, 0.5
      %v1789 = vtanh.pop %v1788
      %v1790 = vmul.f32 %v1789, 0.5
      %v1791 = vadd.f32 %v1790, 0.5
      %v1792 = vtanh.pop %v1628
      %v1793 = vmul.f32 %v1629, 0.5
      %v1794 = vtanh.pop %v1793
      %v1795 = vmul.f32 %v1794, 0.5
      %v1796 = vadd.f32 %v1795, 0.5
      %v1797 = vmul.f32 %v1791, %v1783
      %v1798 = vmul.f32 %v1787, %v1792
      %v1799 = vadd.f32 %v1797, %v1798
      %v1800 = vtanh.pop %v1799
      %v1801 = vmul.f32 %v1796, %v1800
      %v1802 = vld [vmem:[#allocation5] sm:$0xff]
      %v1803 = vmul.f32 %v1779, 0.5
      %v1804 = vtanh.pop %v1803
      %v1805 = vmul.f32 %v1804, 0.5
      %v1806 = vadd.f32 %v1805, 0.5
      %v1807 = vmul.f32 %v1780, 0.5
      %v1808 = vtanh.pop %v1807
      %v1809 = vmul.f32 %v1808, 0.5
      %v1810 = vadd.f32 %v1809, 0.5
      %v1811 = vtanh.pop %v1781
      %v1812 = vmul.f32 %v1782, 0.5
      %v1813 = vtanh.pop %v1812
      %v1814 = vmul.f32 %v1813, 0.5
      %v1815 = vadd.f32 %v1814, 0.5
      %v1816 = vmul.f32 %v1810, %v1802
      %v1817 = vmul.f32 %v1806, %v1811
      %v1818 = vadd.f32 %v1816, %v1817
      %v1819 = vtanh.pop %v1818
      %v1820 = vmul.f32 %v1815, %v1819
      %1821 = vst [vmem:[#allocation2] sm:$0xff] %v1801
      %1822 = vst [vmem:[#allocation3] sm:$0xff] %v1799
      %1823 = vst [vmem:[#allocation4] sm:$0xff] %v1820
      %1824 = vst [vmem:[#allocation5] sm:$0xff] %v1818
      %s1825 = scalar_lea.vmem %s272, 24
      %1826 = vst [vmem:[%s1825] sm:$0xff] %v1801
      %1827 = vst [vmem:[%s279] sm:$0xff] %v1820
      %s1828 = smul.u32 4, %s17
      %p1829 = scmp.lt.s32.totalorder %s1828, 7
      %s1830 = scalar_select %p1829, %s1828, 7
      %s1831 = smul.addr %s1830, 8
      %s1832 = scalar_lea.vmem %s4, %s1831
      %s1833 = ssub.s32 1, %s17
      %s1834 = smul.u32 4, %s1833
      %p1835 = scmp.lt.s32.totalorder %s1834, 7
      %s1836 = scalar_select %p1835, %s1834, 7
      %s1837 = smul.addr %s1836, 8
      %s1838 = scalar_lea.vmem %s5, %s1837
      // Predicated region
      $region41: #{bidirectional_lstm.1} parent=35 // pred_check
        %p1839 = pneg %p131
      $region42: #{bidirectional_lstm.1} parent=35 // pred_check_branch
        %1841 = sbr.rel (%p1839) target = $region44
      $region43: #{bidirectional_lstm.1} parent=35 // pred_region
        %s1842 = smul.u32 4, %s17
      $region44: #{bidirectional_lstm.1} parent=35 // pred_fallthru
        _
      // Predicated region
      $region45: #{bidirectional_lstm.1} parent=35 // pred_check
        %p1843 = pneg %p159
      $region46: #{bidirectional_lstm.1} parent=35 // pred_check_branch
        %1845 = sbr.rel (%p1843) target = $region48
      $region47: #{bidirectional_lstm.1} parent=35 // pred_region
        %s1846 = ssub.s32 1, %s17
        %s1847 = smul.u32 4, %s1846
      $region48: #{bidirectional_lstm.1} parent=35 // pred_fallthru
        _
    $region36: #{bidirectional_lstm.1} parent=5 // pred_fallthru
      _
    %p1848 = scmp.le.s32.totalorder 2, %s12
    // Predicated region
    $region49: #{bidirectional_lstm.1} parent=5 // pred_check
      %p1849 = pneg %p1848
    $region50: #{bidirectional_lstm.1} parent=5 // pred_check_branch
      %1851 = sbr.rel (%p1849) target = $region52
    $region51: #{bidirectional_lstm.1} parent=5 // pred_region
      %s1852 = ssub.s32 %s12, 2
      // Predicated region
      $region53: #{bidirectional_lstm.1} parent=51 // pred_check
        %p1853 = pneg %p137
      $region54: #{bidirectional_lstm.1} parent=51 // pred_check_branch
        %1855 = sbr.rel (%p1853) target = $region56
      $region55: #{bidirectional_lstm.1} parent=51 // pred_region
        %s1856 = smul.u32 4, %s18
        %p1857 = scmp.lt.s32.totalorder %s1856, 7
        %s1858 = scalar_select %p1857, %s1856, 7
        %s1859 = smul.addr %s1858, 8
        %s1860 = scalar_lea.vmem %s4, %s1859
      $region56: #{bidirectional_lstm.1} parent=51 // pred_fallthru
        _
      // Predicated region
      $region57: #{bidirectional_lstm.1} parent=51 // pred_check
        %p1861 = pneg %p165
      $region58: #{bidirectional_lstm.1} parent=51 // pred_check_branch
        %1863 = sbr.rel (%p1861) target = $region60
      $region59: #{bidirectional_lstm.1} parent=51 // pred_region
        %s1864 = ssub.s32 1, %s18
        %s1865 = smul.u32 4, %s1864
        %p1866 = scmp.lt.s32.totalorder %s1865, 7
        %s1867 = scalar_select %p1866, %s1865, 7
        %s1868 = smul.addr %s1867, 8
        %s1869 = scalar_lea.vmem %s5, %s1868
      $region60: #{bidirectional_lstm.1} parent=51 // pred_fallthru
        _
    $region52: #{bidirectional_lstm.1} parent=5 // pred_fallthru
      _
  $region6: #{bidirectional_lstm.1} parent=0 // loop_footer
    %s16 = sadd.s32 1, %s12
  $region7: #{bidirectional_lstm.1} parent=0 // loop_footer_branch
    %11 = sbr.rel target = $region3
  $region8: #{bidirectional_lstm.1} parent=0 // loop_exit
    _

</llo_original>
